<compile_context>
chip_gen: v6e
topology: v6e:2x2x1
jax: 0.10.0
libtpu: 0.0.40
codegen_flags: <defaults>
</compile_context>

<pallas_src>
import functools
import math

import jax
import jax.numpy as jnp
from jax.experimental import pallas as pl
from jax.experimental.pallas import tpu as pltpu


def _round_up(x: int, m: int) -> int:
    return ((x + m - 1) // m) * m


def _next_pow2(x: int) -> int:
    return 1 << max(int(x) - 1, 0).bit_length()


def _pow2_floor(x: int) -> int:
    return 1 << (max(int(x), 1).bit_length() - 1)


# --------------------------------------------------------------- kernels ----

def _transform_kernel(x_ref, inv_ref, w_ref, xw_ref):
    """XW = (X * inv_out_degree) @ W   (left norm fused with the weight matmul).

    Inputs are cast to bf16 so the matmul uses the bf16 MXU path; accumulation
    is f32 via preferred_element_type."""
    xs = (x_ref[...].astype(jnp.float32) * inv_ref[...]).astype(jnp.bfloat16)
    xw = jnp.dot(xs, w_ref[...], preferred_element_type=jnp.float32)
    xw_ref[...] = xw.astype(xw_ref.dtype)


def _aggregate_kernel(adj_ref, xw_ref, b_ref, out_ref, acc_ref, *,
                      apply_relu, tk, xw_resident):
    """out = A @ XW + b (optional relu).  Grid = (dst tiles, K chunks).

    adjacency arrives as int8 (0/1) and is cast to bf16 just before the dot;
    XW is either fully VMEM-resident (sliced per K chunk) or K-streamed."""
    k = pl.program_id(1)

    adj = adj_ref[...].astype(jnp.bfloat16)          # int8 0/1 -> bf16, lossless
    if xw_resident:
        start = pl.multiple_of(k * tk, tk)
        xw = xw_ref[pl.ds(start, tk), :]
    else:
        xw = xw_ref[...]
    part = jnp.dot(adj, xw, preferred_element_type=jnp.float32)

    @pl.when(k == 0)
    def _():
        acc_ref[...] = part                          # first chunk: direct store

    @pl.when(k > 0)
    def _():
        acc_ref[...] += part

    @pl.when(k == pl.num_programs(1) - 1)
    def _():
        # TODO(synk): PNY_Norm(prev_x, rst) would be applied to the aggregated
        # result here (before the weight matmul in the original); its
        # definition is not provided, so it is an identity — which also keeps
        # the A @ (X @ W) reassociation valid.
        r = acc_ref[...] + b_ref[...]
        if apply_relu:
            r = jnp.maximum(r, 0.0)
        out_ref[...] = r.astype(out_ref.dtype)


# ------------------------------------------------------- layer / model ------

def _graph_conv_pny_left(adj_i8, inv_deg, x_p, w, b, *, apply_relu, tm, tk,
                         out_dtype, max_resident_xw_bytes):
    """One GraphConv_PNY layer with norm='left' (as constructed by GCN_PNY).

    adj_i8 : (NP, NP) int8 padded adjacency (A[d, s]).
    inv_deg: (NP, 1)  f32 1/clamp(out_degree,1), zero in the padded rows.
    x_p    : (NP, fin_p) padded features (f32 or bf16).
    Returns the padded (NP, fout_p) result in `out_dtype`.
    """
    np_nodes = adj_i8.shape[0]
    fin_p = x_p.shape[1]
    fin, fout = w.shape
    fout_p = _round_up(fout, 128)

    w_p = jnp.pad(w.astype(jnp.bfloat16),
                  ((0, fin_p - fin), (0, fout_p - fout)))
    b_p = jnp.pad(b.astype(jnp.float32), (0, fout_p - fout)).reshape(1, fout_p)

    # ---- stage 1: XW = (X * 1/out_deg) @ W  (bf16, streamed by stage 2) ----
    xw = pl.pallas_call(
        _transform_kernel,
        out_shape=jax.ShapeDtypeStruct((np_nodes, fout_p), jnp.bfloat16),
        grid_spec=pltpu.PrefetchScalarGridSpec(
            num_scalar_prefetch=0,
            grid=(np_nodes // tk,),
            in_specs=[
                pl.BlockSpec((tk, fin_p), lambda i: (i, 0)),
                pl.BlockSpec((tk, 1), lambda i: (i, 0)),
                pl.BlockSpec((fin_p, fout_p), lambda i: (0, 0)),   # W resident
            ],
            out_specs=pl.BlockSpec((tk, fout_p), lambda i: (i, 0)),
        ),
        compiler_params=pltpu.CompilerParams(
            dimension_semantics=("parallel",)),
    )(x_p, inv_deg, w_p)

    # ---- stage 2: out = A @ XW + b (optional relu), K-tiled f32 accumulate --
    xw_bytes = np_nodes * fout_p * 2
    xw_resident = xw_bytes <= max_resident_xw_bytes
    if xw_resident:
        xw_spec = pl.BlockSpec((np_nodes, fout_p), lambda i, k: (0, 0))
        xw_vmem = 2 * xw_bytes                          # (conservative: 2 bufs)
    else:
        xw_spec = pl.BlockSpec((tk, fout_p), lambda i, k: (k, 0))
        xw_vmem = 2 * tk * fout_p * 2

    out_itemsize = jnp.dtype(out_dtype).itemsize
    vmem_budget = (2 * tm * tk                          # int8 adj, double-buffered
                   + xw_vmem
                   + tm * fout_p * 4                    # f32 accumulator scratch
                   + 2 * tm * fout_p * out_itemsize     # output, double-buffered
                   + 2 * fout_p * 4                     # bias
                   + (4 << 20))                         # headroom
    # Clamp to 48 MiB so the same configuration also fits v7x's 64 MiB VMEM.
    vmem_limit = int(max(32 << 20, min(48 << 20, vmem_budget)))

    out_p = pl.pallas_call(
        functools.partial(_aggregate_kernel, apply_relu=apply_relu,
                          tk=tk, xw_resident=xw_resident),
        out_shape=jax.ShapeDtypeStruct((np_nodes, fout_p), out_dtype),
        grid_spec=pltpu.PrefetchScalarGridSpec(
            num_scalar_prefetch=0,
            grid=(np_nodes // tm, np_nodes // tk),
            in_specs=[
                pl.BlockSpec((tm, tk), lambda i, k: (i, k)),       # adjacency (int8)
                xw_spec,                                           # XW (resident/stream)
                pl.BlockSpec((1, fout_p), lambda i, k: (0, 0)),    # bias (tiny)
            ],
            out_specs=pl.BlockSpec((tm, fout_p), lambda i, k: (i, 0)),
            scratch_shapes=[pltpu.VMEM((tm, fout_p), jnp.float32)],
        ),
        compiler_params=pltpu.CompilerParams(
            dimension_semantics=("parallel", "arbitrary"),
            vmem_limit_bytes=vmem_limit,
        ),
    )(adj_i8, xw, b_p)

    return out_p


@functools.partial(jax.jit,
                   static_argnames=("tm", "tk", "max_resident_xw_bytes"))
def gcn_pny_forward(adj, feat, w1, b1, w2, b2, *, tm=512, tk=512,
                    max_resident_xw_bytes=12 * 1024 * 1024):
    """GCN_PNY forward (2 GraphConv_PNY layers, norm='left', relu in between).

    tm: destination-node tile, tk: source-node (reduction) tile; both are
    floored to powers of two and clamped so all blocks are tile-aligned, no
    trailing rows are dropped, and (when possible) at least two destination
    tiles exist so v7x's two TensorCores both get work.
    """
    n = adj.shape[0]
    fin = feat.shape[1]
    out_size = w2.shape[1]
    fin_p = _round_up(fin, 128)

    np2 = _next_pow2(n)
    tm_e = max(32, min(_pow2_floor(tm), np2))    # int8 sublane packing: mult of 32
    tk_e = max(128, min(_pow2_floor(tk), np2))   # lane dim: mult of 128
    # v7x megacore: keep >= 2 destination tiles when possible (no-op on the
    # single-TC v5e/v6e).
    while tm_e > 32 and _round_up(n, max(tm_e, tk_e)) // tm_e < 2:
        tm_e //= 2
    NP = _round_up(n, max(tm_e, tk_e))           # both tm_e and tk_e divide NP

    # Padded int8 adjacency built directly (0/1 -> int8 is lossless); no f32
    # N^2 intermediates are materialized before the kernels run.
    adj_i8 = jnp.pad(adj.astype(jnp.int8), ((0, NP - n), (0, NP - n)))
    # norm='left': scale source features by 1 / clamp(out_degree, 1).
    # A[d, s] = 1 iff edge s -> d, so out-degree(s) is the column sum.
    inv_deg = 1.0 / jnp.maximum(jnp.sum(adj, axis=0), 1.0)
    inv_deg = jnp.pad(inv_deg.astype(jnp.float32), (0, NP - n)).reshape(NP, 1)

    x_p = jnp.pad(feat.astype(jnp.float32), ((0, NP - n), (0, fin_p - fin)))

    h = _graph_conv_pny_left(
        adj_i8, inv_deg, x_p, w1, b1, apply_relu=True, tm=tm_e, tk=tk_e,
        out_dtype=jnp.bfloat16, max_resident_xw_bytes=max_resident_xw_bytes)
    # TODO(synk): nn.Dropout(0.5) between layers is a training-time op
    # (identity in eval mode), so it is omitted here.
    # Layer-1 output stays padded + bf16 and feeds layer 2's transform directly
    # (layer-2 fin_p == layer-1 fout_p); no slice / re-pad / f32 round trip.
    out_p = _graph_conv_pny_left(
        adj_i8, inv_deg, h, w2, b2, apply_relu=False, tm=tm_e, tk=tk_e,
        out_dtype=jnp.float32, max_resident_xw_bytes=max_resident_xw_bytes)
    return out_p[:n, :out_size]


if __name__ == "__main__":
    N = 200
    IN_SIZE, HID_SIZE, OUT_SIZE = 48, 64, 24

    key = jax.random.PRNGKey(0)
    k_feat, k_adj, k_w1, k_w2, k_b1, k_b2 = jax.random.split(key, 6)

    feat = jax.random.normal(k_feat, (N, IN_SIZE), dtype=jnp.float32)

    # Random sparse directed graph + self-loops (no zero in-degree nodes,
    # matching the allow_zero_in_degree check).
    adj = (jax.random.uniform(k_adj, (N, N)) < 0.1).astype(jnp.float32)
    adj = jnp.maximum(adj, jnp.eye(N, dtype=jnp.float32))

    def xavier(k, fan_in, fan_out):
        bound = math.sqrt(6.0 / (fan_in + fan_out))
        return jax.random.uniform(k, (fan_in, fan_out), jnp.float32, -bound, bound)

    w1 = xavier(k_w1, IN_SIZE, HID_SIZE)
    w2 = xavier(k_w2, HID_SIZE, OUT_SIZE)
    # reset_parameters() zeros the biases; small random values are used here so
    # the bias path is actually exercised by the numeric check.
    b1 = 0.1 * jax.random.normal(k_b1, (HID_SIZE,), dtype=jnp.float32)
    b2 = 0.1 * jax.random.normal(k_b2, (OUT_SIZE,), dtype=jnp.float32)

    # Default (large, MXU-sized) tiles with resident XW; deliberately small
    # tiles that exercise the multi-step dst/K accumulation + padding paths;
    # and a run with residency disabled to exercise the K-streamed XW path.
    out_default = jax.block_until_ready(
        gcn_pny_forward(adj, feat, w1, b1, w2, b2))
    out_small = jax.block_until_ready(
        gcn_pny_forward(adj, feat, w1, b1, w2, b2, tm=64, tk=128))
    out_stream = jax.block_until_ready(
        gcn_pny_forward(adj, feat, w1, b1, w2, b2, tm=64, tk=128,
                        max_resident_xw_bytes=0))

    # Pure-JAX f32 reference of the same forward (PNY_Norm identity, eval-mode
    # dropout).
    def ref_layer(x, w, b, relu):
        deg = jnp.maximum(jnp.sum(adj, axis=0), 1.0)       # out-degrees
        xs = x * (1.0 / deg)[:, None]                      # norm='left'
        r = (adj @ xs) @ w + b
        return jnp.maximum(r, 0.0) if relu else r

    ref = ref_layer(ref_layer(feat, w1, b1, True), w2, b2, False)

    assert out_default.shape == (N, OUT_SIZE)
    assert out_small.shape == (N, OUT_SIZE)
    assert out_stream.shape == (N, OUT_SIZE)
    # bf16 transform / XW / inter-layer streaming with f32 accumulation ->
    # low-percent noise vs the f32 reference.
    assert jnp.allclose(out_default, ref, atol=4e-2, rtol=4e-2), float(
        jnp.max(jnp.abs(out_default - ref)))
    assert jnp.allclose(out_small, ref, atol=4e-2, rtol=4e-2), float(
        jnp.max(jnp.abs(out_small - ref)))
    assert jnp.allclose(out_stream, ref, atol=4e-2, rtol=4e-2), float(
        jnp.max(jnp.abs(out_stream - ref)))
    assert jnp.allclose(out_default, out_small, atol=2e-2, rtol=2e-2)
    assert jnp.allclose(out_small, out_stream, atol=2e-2, rtol=2e-2)

    print("KERNEL_OK")
</pallas_src>

<mosaic_0001>
module attributes {stable_mosaic.version = 11 : i64} {
  func.func @_transform_kernel(%arg0: i32, %arg1: memref<256x128xf32, #tpu.memory_space<vmem>>, %arg2: memref<256x1xf32, #tpu.memory_space<vmem>>, %arg3: memref<128x128xbf16, #tpu.memory_space<vmem>>, %arg4: memref<256x128xbf16, #tpu.memory_space<vmem>>) attributes {dimension_semantics = [#tpu.dimension_semantics<parallel>], iteration_bounds = array<i64: 1>, scalar_prefetch = 0 : i64, scratch_operands = 0 : i64, tpu.core_type = #tpu.core_type<tc>, window_params = [{transform_indices = @transform_0, window_bounds = array<i64: 256, 128>}, {transform_indices = @transform_1, window_bounds = array<i64: 256, 1>}, {pipeline_mode = #tpu.pipeline_mode<synchronous>, transform_indices = @transform_2, window_bounds = array<i64: 128, 128>}, {transform_indices = @transform_3, window_bounds = array<i64: 256, 128>}]} {
    %c0 = arith.constant 0 : index
    %c0_0 = arith.constant 0 : index
    %0 = vector.load %arg1[%c0, %c0_0] : memref<256x128xf32, #tpu.memory_space<vmem>>, vector<256x128xf32>
    %c0_1 = arith.constant 0 : index
    %c0_2 = arith.constant 0 : index
    %1 = vector.load %arg2[%c0_1, %c0_2] : memref<256x1xf32, #tpu.memory_space<vmem>>, vector<256x1xf32>
    %2 = vector.broadcast %1 : vector<256x1xf32> to vector<256x128xf32>
    %3 = arith.mulf %0, %2 : vector<256x128xf32>
    %4 = arith.truncf %3 : vector<256x128xf32> to vector<256x128xbf16>
    %c0_3 = arith.constant 0 : index
    %c0_4 = arith.constant 0 : index
    %5 = vector.load %arg3[%c0_3, %c0_4] : memref<128x128xbf16, #tpu.memory_space<vmem>>, vector<128x128xbf16>
    %cst = arith.constant dense<0.000000e+00> : vector<256x128xf32>
    %6 = tpu.matmul %4, %5, %cst {dimension_numbers = #tpu.dot_dimension_numbers<[1], [0], [0], [1], [0, 0, 1, 1], [], []>} : vector<256x128xbf16>, vector<128x128xbf16>, vector<256x128xf32> -> vector<256x128xf32>
    %7 = arith.truncf %6 : vector<256x128xf32> to vector<256x128xbf16>
    %c0_5 = arith.constant 0 : index
    %c0_6 = arith.constant 0 : index
    %8 = vector.load %arg4[%c0_5, %c0_6] : memref<256x128xbf16, #tpu.memory_space<vmem>>, vector<256x128xbf16>
    tpu.vector_store %arg4[%c0_5, %c0_6], %7 {strides = array<i32>} : memref<256x128xbf16, #tpu.memory_space<vmem>>, vector<256x128xbf16>,
    return
  }
  func.func @transform_0(%arg0: i32) -> (i32, i32) {
    %c0_i32 = arith.constant 0 : i32
    %c0_i32_0 = arith.constant 0 : i32
    return %arg0, %c0_i32 : i32, i32
  }
  func.func @transform_1(%arg0: i32) -> (i32, i32) {
    %c0_i32 = arith.constant 0 : i32
    %c0_i32_0 = arith.constant 0 : i32
    return %arg0, %c0_i32 : i32, i32
  }
  func.func @transform_2(%arg0: i32) -> (i32, i32) {
    %c0_i32 = arith.constant 0 : i32
    %c0_i32_0 = arith.constant 0 : i32
    %c0_i32_1 = arith.constant 0 : i32
    return %c0_i32, %c0_i32_0 : i32, i32
  }
  func.func @transform_3(%arg0: i32) -> (i32, i32) {
    %c0_i32 = arith.constant 0 : i32
    %c0_i32_0 = arith.constant 0 : i32
    return %arg0, %c0_i32 : i32, i32
  }
}

module attributes {stable_mosaic.version = 11 : i64} {
  func.func @_aggregate_kernel(%arg0: i32, %arg1: i32, %arg2: memref<128x256xi8, #tpu.memory_space<vmem>>, %arg3: memref<256x128xbf16, #tpu.memory_space<vmem>>, %arg4: memref<1x128xf32, #tpu.memory_space<vmem>>, %arg5: memref<128x128xbf16, #tpu.memory_space<vmem>>, %arg6: memref<128x128xf32, #tpu.memory_space<vmem>>) attributes {dimension_semantics = [#tpu.dimension_semantics<parallel>, #tpu.dimension_semantics<arbitrary>], iteration_bounds = array<i64: 2, 1>, scalar_prefetch = 0 : i64, scratch_operands = 1 : i64, tpu.core_type = #tpu.core_type<tc>, window_params = [{transform_indices = @transform_0, window_bounds = array<i64: 128, 256>}, {pipeline_mode = #tpu.pipeline_mode<synchronous>, transform_indices = @transform_1, window_bounds = array<i64: 256, 128>}, {pipeline_mode = #tpu.pipeline_mode<synchronous>, transform_indices = @transform_2, window_bounds = array<i64: 1, 128>}, {transform_indices = @transform_3, window_bounds = array<i64: 128, 128>}]} {
    %c0 = arith.constant 0 : index
    %c0_0 = arith.constant 0 : index
    %0 = vector.load %arg2[%c0, %c0_0] : memref<128x256xi8, #tpu.memory_space<vmem>>, vector<128x256xi8>
    %1 = arith.sitofp %0 : vector<128x256xi8> to vector<128x256xbf16>
    %c256_i32 = arith.constant 256 : i32
    %2 = arith.muli %arg1, %c256_i32 : i32
    %3 = tpu.assume_multiple %2, 256 : i32
    %4 = arith.index_cast %3 : i32 to index
    %c0_1 = arith.constant 0 : index
    %5 = vector.load %arg3[%4, %c0_1] : memref<256x128xbf16, #tpu.memory_space<vmem>>, vector<256x128xbf16>
    %cst = arith.constant dense<0.000000e+00> : vector<128x128xf32>
    %6 = tpu.matmul %1, %5, %cst {dimension_numbers = #tpu.dot_dimension_numbers<[1], [0], [0], [1], [0, 0, 1, 1], [], []>} : vector<128x256xbf16>, vector<256x128xbf16>, vector<128x128xf32> -> vector<128x128xf32>
    %c0_i32 = arith.constant 0 : i32
    %7 = arith.cmpi eq, %arg1, %c0_i32 : i32
    %8 = arith.extui %7 : i1 to i32
    %c0_i32_2 = arith.constant 0 : i32
    %9 = arith.cmpi ne, %8, %c0_i32_2 : i32
    scf.if %9 {
      %c0_7 = arith.constant 0 : index
      %c0_8 = arith.constant 0 : index
      %16 = vector.load %arg6[%c0_7, %c0_8] : memref<128x128xf32, #tpu.memory_space<vmem>>, vector<128x128xf32>
      tpu.vector_store %arg6[%c0_7, %c0_8], %6 {strides = array<i32>} : memref<128x128xf32, #tpu.memory_space<vmem>>, vector<128x128xf32>,
    } else {
    }
    %c0_i32_3 = arith.constant 0 : i32
    %10 = arith.cmpi sgt, %arg1, %c0_i32_3 : i32
    %11 = arith.extui %10 : i1 to i32
    %c0_i32_4 = arith.constant 0 : i32
    %12 = arith.cmpi ne, %11, %c0_i32_4 : i32
    scf.if %12 {
      %c0_7 = arith.constant 0 : index
      %c0_8 = arith.constant 0 : index
      %16 = vector.load %arg6[%c0_7, %c0_8] : memref<128x128xf32, #tpu.memory_space<vmem>>, vector<128x128xf32>
      %17 = arith.addf %16, %6 : vector<128x128xf32>
      %c0_9 = arith.constant 0 : index
      %c0_10 = arith.constant 0 : index
      %18 = vector.load %arg6[%c0_9, %c0_10] : memref<128x128xf32, #tpu.memory_space<vmem>>, vector<128x128xf32>
      tpu.vector_store %arg6[%c0_9, %c0_10], %17 {strides = array<i32>} : memref<128x128xf32, #tpu.memory_space<vmem>>, vector<128x128xf32>,
    } else {
    }
    %c0_i32_5 = arith.constant 0 : i32
    %13 = arith.cmpi eq, %arg1, %c0_i32_5 : i32
    %14 = arith.extui %13 : i1 to i32
    %c0_i32_6 = arith.constant 0 : i32
    %15 = arith.cmpi ne, %14, %c0_i32_6 : i32
    scf.if %15 {
      %c0_7 = arith.constant 0 : index
      %c0_8 = arith.constant 0 : index
      %16 = vector.load %arg6[%c0_7, %c0_8] : memref<128x128xf32, #tpu.memory_space<vmem>>, vector<128x128xf32>
      %c0_9 = arith.constant 0 : index
      %c0_10 = arith.constant 0 : index
      %17 = vector.load %arg4[%c0_9, %c0_10] : memref<1x128xf32, #tpu.memory_space<vmem>>, vector<1x128xf32>
      %18 = vector.broadcast %17 : vector<1x128xf32> to vector<128x128xf32>
      %19 = arith.addf %16, %18 : vector<128x128xf32>
      %cst_11 = arith.constant 0.000000e+00 : f32
      %20 = vector.broadcast %cst_11 : f32 to vector<128x128xf32>
      %21 = arith.maximumf %19, %20 : vector<128x128xf32>
      %22 = arith.truncf %21 : vector<128x128xf32> to vector<128x128xbf16>
      %c0_12 = arith.constant 0 : index
      %c0_13 = arith.constant 0 : index
      %23 = vector.load %arg5[%c0_12, %c0_13] : memref<128x128xbf16, #tpu.memory_space<vmem>>, vector<128x128xbf16>
      tpu.vector_store %arg5[%c0_12, %c0_13], %22 {strides = array<i32>} : memref<128x128xbf16, #tpu.memory_space<vmem>>, vector<128x128xbf16>,
    } else {
    }
    return
  }
  func.func @transform_0(%arg0: i32, %arg1: i32) -> (i32, i32) {
    %c0_i32 = arith.constant 0 : i32
    return %arg0, %arg1 : i32, i32
  }
  func.func @transform_1(%arg0: i32, %arg1: i32) -> (i32, i32) {
    %c0_i32 = arith.constant 0 : i32
    %c0_i32_0 = arith.constant 0 : i32
    %c0_i32_1 = arith.constant 0 : i32
    return %c0_i32, %c0_i32_0 : i32, i32
  }
  func.func @transform_2(%arg0: i32, %arg1: i32) -> (i32, i32) {
    %c0_i32 = arith.constant 0 : i32
    %c0_i32_0 = arith.constant 0 : i32
    %c0_i32_1 = arith.constant 0 : i32
    return %c0_i32, %c0_i32_0 : i32, i32
  }
  func.func @transform_3(%arg0: i32, %arg1: i32) -> (i32, i32) {
    %c0_i32 = arith.constant 0 : i32
    %c0_i32_0 = arith.constant 0 : i32
    return %arg0, %c0_i32 : i32, i32
  }
}

module attributes {stable_mosaic.version = 11 : i64} {
  func.func @_transform_kernel(%arg0: i32, %arg1: memref<256x128xbf16, #tpu.memory_space<vmem>>, %arg2: memref<256x1xf32, #tpu.memory_space<vmem>>, %arg3: memref<128x128xbf16, #tpu.memory_space<vmem>>, %arg4: memref<256x128xbf16, #tpu.memory_space<vmem>>) attributes {dimension_semantics = [#tpu.dimension_semantics<parallel>], iteration_bounds = array<i64: 1>, scalar_prefetch = 0 : i64, scratch_operands = 0 : i64, tpu.core_type = #tpu.core_type<tc>, window_params = [{transform_indices = @transform_0, window_bounds = array<i64: 256, 128>}, {transform_indices = @transform_1, window_bounds = array<i64: 256, 1>}, {pipeline_mode = #tpu.pipeline_mode<synchronous>, transform_indices = @transform_2, window_bounds = array<i64: 128, 128>}, {transform_indices = @transform_3, window_bounds = array<i64: 256, 128>}]} {
    %c0 = arith.constant 0 : index
    %c0_0 = arith.constant 0 : index
    %0 = vector.load %arg1[%c0, %c0_0] : memref<256x128xbf16, #tpu.memory_space<vmem>>, vector<256x128xbf16>
    %1 = arith.extf %0 : vector<256x128xbf16> to vector<256x128xf32>
    %c0_1 = arith.constant 0 : index
    %c0_2 = arith.constant 0 : index
    %2 = vector.load %arg2[%c0_1, %c0_2] : memref<256x1xf32, #tpu.memory_space<vmem>>, vector<256x1xf32>
    %3 = vector.broadcast %2 : vector<256x1xf32> to vector<256x128xf32>
    %4 = arith.mulf %1, %3 : vector<256x128xf32>
    %5 = arith.truncf %4 : vector<256x128xf32> to vector<256x128xbf16>
    %c0_3 = arith.constant 0 : index
    %c0_4 = arith.constant 0 : index
    %6 = vector.load %arg3[%c0_3, %c0_4] : memref<128x128xbf16, #tpu.memory_space<vmem>>, vector<128x128xbf16>
    %cst = arith.constant dense<0.000000e+00> : vector<256x128xf32>
    %7 = tpu.matmul %5, %6, %cst {dimension_numbers = #tpu.dot_dimension_numbers<[1], [0], [0], [1], [0, 0, 1, 1], [], []>} : vector<256x128xbf16>, vector<128x128xbf16>, vector<256x128xf32> -> vector<256x128xf32>
    %8 = arith.truncf %7 : vector<256x128xf32> to vector<256x128xbf16>
    %c0_5 = arith.constant 0 : index
    %c0_6 = arith.constant 0 : index
    %9 = vector.load %arg4[%c0_5, %c0_6] : memref<256x128xbf16, #tpu.memory_space<vmem>>, vector<256x128xbf16>
    tpu.vector_store %arg4[%c0_5, %c0_6], %8 {strides = array<i32>} : memref<256x128xbf16, #tpu.memory_space<vmem>>, vector<256x128xbf16>,
    return
  }
  func.func @transform_0(%arg0: i32) -> (i32, i32) {
    %c0_i32 = arith.constant 0 : i32
    %c0_i32_0 = arith.constant 0 : i32
    return %arg0, %c0_i32 : i32, i32
  }
  func.func @transform_1(%arg0: i32) -> (i32, i32) {
    %c0_i32 = arith.constant 0 : i32
    %c0_i32_0 = arith.constant 0 : i32
    return %arg0, %c0_i32 : i32, i32
  }
  func.func @transform_2(%arg0: i32) -> (i32, i32) {
    %c0_i32 = arith.constant 0 : i32
    %c0_i32_0 = arith.constant 0 : i32
    %c0_i32_1 = arith.constant 0 : i32
    return %c0_i32, %c0_i32_0 : i32, i32
  }
  func.func @transform_3(%arg0: i32) -> (i32, i32) {
    %c0_i32 = arith.constant 0 : i32
    %c0_i32_0 = arith.constant 0 : i32
    return %arg0, %c0_i32 : i32, i32
  }
}

module attributes {stable_mosaic.version = 11 : i64} {
  func.func @_aggregate_kernel(%arg0: i32, %arg1: i32, %arg2: memref<128x256xi8, #tpu.memory_space<vmem>>, %arg3: memref<256x128xbf16, #tpu.memory_space<vmem>>, %arg4: memref<1x128xf32, #tpu.memory_space<vmem>>, %arg5: memref<128x128xf32, #tpu.memory_space<vmem>>, %arg6: memref<128x128xf32, #tpu.memory_space<vmem>>) attributes {dimension_semantics = [#tpu.dimension_semantics<parallel>, #tpu.dimension_semantics<arbitrary>], iteration_bounds = array<i64: 2, 1>, scalar_prefetch = 0 : i64, scratch_operands = 1 : i64, tpu.core_type = #tpu.core_type<tc>, window_params = [{transform_indices = @transform_0, window_bounds = array<i64: 128, 256>}, {pipeline_mode = #tpu.pipeline_mode<synchronous>, transform_indices = @transform_1, window_bounds = array<i64: 256, 128>}, {pipeline_mode = #tpu.pipeline_mode<synchronous>, transform_indices = @transform_2, window_bounds = array<i64: 1, 128>}, {transform_indices = @transform_3, window_bounds = array<i64: 128, 128>}]} {
    %c0 = arith.constant 0 : index
    %c0_0 = arith.constant 0 : index
    %0 = vector.load %arg2[%c0, %c0_0] : memref<128x256xi8, #tpu.memory_space<vmem>>, vector<128x256xi8>
    %1 = arith.sitofp %0 : vector<128x256xi8> to vector<128x256xbf16>
    %c256_i32 = arith.constant 256 : i32
    %2 = arith.muli %arg1, %c256_i32 : i32
    %3 = tpu.assume_multiple %2, 256 : i32
    %4 = arith.index_cast %3 : i32 to index
    %c0_1 = arith.constant 0 : index
    %5 = vector.load %arg3[%4, %c0_1] : memref<256x128xbf16, #tpu.memory_space<vmem>>, vector<256x128xbf16>
    %cst = arith.constant dense<0.000000e+00> : vector<128x128xf32>
    %6 = tpu.matmul %1, %5, %cst {dimension_numbers = #tpu.dot_dimension_numbers<[1], [0], [0], [1], [0, 0, 1, 1], [], []>} : vector<128x256xbf16>, vector<256x128xbf16>, vector<128x128xf32> -> vector<128x128xf32>
    %c0_i32 = arith.constant 0 : i32
    %7 = arith.cmpi eq, %arg1, %c0_i32 : i32
    %8 = arith.extui %7 : i1 to i32
    %c0_i32_2 = arith.constant 0 : i32
    %9 = arith.cmpi ne, %8, %c0_i32_2 : i32
    scf.if %9 {
      %c0_7 = arith.constant 0 : index
      %c0_8 = arith.constant 0 : index
      %16 = vector.load %arg6[%c0_7, %c0_8] : memref<128x128xf32, #tpu.memory_space<vmem>>, vector<128x128xf32>
      tpu.vector_store %arg6[%c0_7, %c0_8], %6 {strides = array<i32>} : memref<128x128xf32, #tpu.memory_space<vmem>>, vector<128x128xf32>,
    } else {
    }
    %c0_i32_3 = arith.constant 0 : i32
    %10 = arith.cmpi sgt, %arg1, %c0_i32_3 : i32
    %11 = arith.extui %10 : i1 to i32
    %c0_i32_4 = arith.constant 0 : i32
    %12 = arith.cmpi ne, %11, %c0_i32_4 : i32
    scf.if %12 {
      %c0_7 = arith.constant 0 : index
      %c0_8 = arith.constant 0 : index
      %16 = vector.load %arg6[%c0_7, %c0_8] : memref<128x128xf32, #tpu.memory_space<vmem>>, vector<128x128xf32>
      %17 = arith.addf %16, %6 : vector<128x128xf32>
      %c0_9 = arith.constant 0 : index
      %c0_10 = arith.constant 0 : index
      %18 = vector.load %arg6[%c0_9, %c0_10] : memref<128x128xf32, #tpu.memory_space<vmem>>, vector<128x128xf32>
      tpu.vector_store %arg6[%c0_9, %c0_10], %17 {strides = array<i32>} : memref<128x128xf32, #tpu.memory_space<vmem>>, vector<128x128xf32>,
    } else {
    }
    %c0_i32_5 = arith.constant 0 : i32
    %13 = arith.cmpi eq, %arg1, %c0_i32_5 : i32
    %14 = arith.extui %13 : i1 to i32
    %c0_i32_6 = arith.constant 0 : i32
    %15 = arith.cmpi ne, %14, %c0_i32_6 : i32
    scf.if %15 {
      %c0_7 = arith.constant 0 : index
      %c0_8 = arith.constant 0 : index
      %16 = vector.load %arg6[%c0_7, %c0_8] : memref<128x128xf32, #tpu.memory_space<vmem>>, vector<128x128xf32>
      %c0_9 = arith.constant 0 : index
      %c0_10 = arith.constant 0 : index
      %17 = vector.load %arg4[%c0_9, %c0_10] : memref<1x128xf32, #tpu.memory_space<vmem>>, vector<1x128xf32>
      %18 = vector.broadcast %17 : vector<1x128xf32> to vector<128x128xf32>
      %19 = arith.addf %16, %18 : vector<128x128xf32>
      %c0_11 = arith.constant 0 : index
      %c0_12 = arith.constant 0 : index
      %20 = vector.load %arg5[%c0_11, %c0_12] : memref<128x128xf32, #tpu.memory_space<vmem>>, vector<128x128xf32>
      tpu.vector_store %arg5[%c0_11, %c0_12], %19 {strides = array<i32>} : memref<128x128xf32, #tpu.memory_space<vmem>>, vector<128x128xf32>,
    } else {
    }
    return
  }
  func.func @transform_0(%arg0: i32, %arg1: i32) -> (i32, i32) {
    %c0_i32 = arith.constant 0 : i32
    return %arg0, %arg1 : i32, i32
  }
  func.func @transform_1(%arg0: i32, %arg1: i32) -> (i32, i32) {
    %c0_i32 = arith.constant 0 : i32
    %c0_i32_0 = arith.constant 0 : i32
    %c0_i32_1 = arith.constant 0 : i32
    return %c0_i32, %c0_i32_0 : i32, i32
  }
  func.func @transform_2(%arg0: i32, %arg1: i32) -> (i32, i32) {
    %c0_i32 = arith.constant 0 : i32
    %c0_i32_0 = arith.constant 0 : i32
    %c0_i32_1 = arith.constant 0 : i32
    return %c0_i32, %c0_i32_0 : i32, i32
  }
  func.func @transform_3(%arg0: i32, %arg1: i32) -> (i32, i32) {
    %c0_i32 = arith.constant 0 : i32
    %c0_i32_0 = arith.constant 0 : i32
    return %arg0, %c0_i32 : i32, i32
  }
}

</mosaic_0001>

<llo_original>
// kernel: gcn_pny_forward.4
$region0: #{gcn_pny_forward.4}
  #allocation0 [shape = 'u32[]', space=smem, size = 0x4, offset = 0x4, fixed_abs, tag = 'smem constant byte address 0x4 - core index']
  #allocation1 [shape = 'u32[144,128]{1,0:T(1,128)}', space=vmem, size = 0x12000, scoped, tag = 'internal scratch']
  %s0 = inlined_call_operand.vmem [shape: f32[256,128], index: 0, kind: input, shape index: {}]
  %s1 = inlined_call_operand.vmem [shape: f32[256,1], index: 1, kind: input, shape index: {}]
  %s2 = inlined_call_operand.vmem [shape: bf16[128,128], index: 2, kind: input, shape index: {}]
  %s3 = inlined_call_operand.vmem [shape: bf16[256,128], index: 3, kind: output, shape index: {}]
  %s4 = sld [smem:[#allocation0]]
  $region22: #{gcn_pny_forward.4} parent=0
    _
  %s6 = ssub.s32 1, %s4
  %s7 = scalar_select 0, %s6, %s4
  // Predicated region
  $region2: #{gcn_pny_forward.4} parent=0 // pred_check
    _
  $region3: #{gcn_pny_forward.4} parent=0 // pred_check_branch
    %9 = sbr.rel (0) target = $region5
  $region4: #{gcn_pny_forward.4} parent=0 // pred_region
    _
  $region5: #{gcn_pny_forward.4} parent=0 // pred_fallthru
    _
  // Predicated region
  $region6: #{gcn_pny_forward.4} parent=0 // pred_check
    _
  $region7: #{gcn_pny_forward.4} parent=0 // pred_check_branch
    %11 = sbr.rel (0) target = $region9
  $region8: #{gcn_pny_forward.4} parent=0 // pred_region
    _
  $region9: #{gcn_pny_forward.4} parent=0 // pred_fallthru
    _
  // Predicated region
  $region10: #{gcn_pny_forward.4} parent=0 // pred_check
    _
  $region11: #{gcn_pny_forward.4} parent=0 // pred_check_branch
    %13 = sbr.rel (0) target = $region13
  $region12: #{gcn_pny_forward.4} parent=0 // pred_region
    _
  $region13: #{gcn_pny_forward.4} parent=0 // pred_fallthru
    _
  %v15 = vld [vmem:[%s0] sm:$0xff]
  %v16 = vld [vmem:[%s0 + $0x8] sm:$0xff]
  %v17 = vld [vmem:[%s0 + $0x10] sm:$0xff]
  %v18 = vld [vmem:[%s0 + $0x18] sm:$0xff]
  %v19 = vld [vmem:[%s0 + $0x20] sm:$0xff]
  %v20 = vld [vmem:[%s0 + $0x28] sm:$0xff]
  %v21 = vld [vmem:[%s0 + $0x30] sm:$0xff]
  %v22 = vld [vmem:[%s0 + $0x38] sm:$0xff]
  %v23 = vld [vmem:[%s0 + $0x40] sm:$0xff]
  %v24 = vld [vmem:[%s0 + $0x48] sm:$0xff]
  %v25 = vld [vmem:[%s0 + $0x50] sm:$0xff]
  %v26 = vld [vmem:[%s0 + $0x58] sm:$0xff]
  %v27 = vld [vmem:[%s0 + $0x60] sm:$0xff]
  %v28 = vld [vmem:[%s0 + $0x68] sm:$0xff]
  %v29 = vld [vmem:[%s0 + $0x70] sm:$0xff]
  %v30 = vld [vmem:[%s0 + $0x78] sm:$0xff]
  %v31 = vld [vmem:[%s0 + $0x80] sm:$0xff]
  %v32 = vld [vmem:[%s0 + $0x88] sm:$0xff]
  %v33 = vld [vmem:[%s0 + $0x90] sm:$0xff]
  %v34 = vld [vmem:[%s0 + $0x98] sm:$0xff]
  %v35 = vld [vmem:[%s0 + $0xa0] sm:$0xff]
  %v36 = vld [vmem:[%s0 + $0xa8] sm:$0xff]
  %v37 = vld [vmem:[%s0 + $0xb0] sm:$0xff]
  %v38 = vld [vmem:[%s0 + $0xb8] sm:$0xff]
  %v39 = vld [vmem:[%s0 + $0xc0] sm:$0xff]
  %v40 = vld [vmem:[%s0 + $0xc8] sm:$0xff]
  %v41 = vld [vmem:[%s0 + $0xd0] sm:$0xff]
  %v42 = vld [vmem:[%s0 + $0xd8] sm:$0xff]
  %v43 = vld [vmem:[%s0 + $0xe0] sm:$0xff]
  %v44 = vld [vmem:[%s0 + $0xe8] sm:$0xff]
  %v45 = vld [vmem:[%s0 + $0xf0] sm:$0xff]
  %v46 = vld [vmem:[%s0 + $0xf8] sm:$0xff]
  %v47 = vld [vmem:[%s1] sm:$0xff]
  %v48 = vld [vmem:[%s1 + $0x8] sm:$0xff]
  %v49 = vld [vmem:[%s1 + $0x10] sm:$0xff]
  %v50 = vld [vmem:[%s1 + $0x18] sm:$0xff]
  %v51 = vld [vmem:[%s1 + $0x20] sm:$0xff]
  %v52 = vld [vmem:[%s1 + $0x28] sm:$0xff]
  %v53 = vld [vmem:[%s1 + $0x30] sm:$0xff]
  %v54 = vld [vmem:[%s1 + $0x38] sm:$0xff]
  %v55 = vld [vmem:[%s1 + $0x40] sm:$0xff]
  %v56 = vld [vmem:[%s1 + $0x48] sm:$0xff]
  %v57 = vld [vmem:[%s1 + $0x50] sm:$0xff]
  %v58 = vld [vmem:[%s1 + $0x58] sm:$0xff]
  %v59 = vld [vmem:[%s1 + $0x60] sm:$0xff]
  %v60 = vld [vmem:[%s1 + $0x68] sm:$0xff]
  %v61 = vld [vmem:[%s1 + $0x70] sm:$0xff]
  %v62 = vld [vmem:[%s1 + $0x78] sm:$0xff]
  %v63 = vld [vmem:[%s1 + $0x80] sm:$0xff]
  %v64 = vld [vmem:[%s1 + $0x88] sm:$0xff]
  %v65 = vld [vmem:[%s1 + $0x90] sm:$0xff]
  %v66 = vld [vmem:[%s1 + $0x98] sm:$0xff]
  %v67 = vld [vmem:[%s1 + $0xa0] sm:$0xff]
  %v68 = vld [vmem:[%s1 + $0xa8] sm:$0xff]
  %v69 = vld [vmem:[%s1 + $0xb0] sm:$0xff]
  %v70 = vld [vmem:[%s1 + $0xb8] sm:$0xff]
  %v71 = vld [vmem:[%s1 + $0xc0] sm:$0xff]
  %v72 = vld [vmem:[%s1 + $0xc8] sm:$0xff]
  %v73 = vld [vmem:[%s1 + $0xd0] sm:$0xff]
  %v74 = vld [vmem:[%s1 + $0xd8] sm:$0xff]
  %v75 = vld [vmem:[%s1 + $0xe0] sm:$0xff]
  %v76 = vld [vmem:[%s1 + $0xe8] sm:$0xff]
  %v77 = vld [vmem:[%s1 + $0xf0] sm:$0xff]
  %v78 = vld [vmem:[%s1 + $0xf8] sm:$0xff]
  %80 = vset.pattern.permute.xlu0 0
  %81 = vperm.xlu0 %80, %v47
  %v82 = vpop.permute.xlu0 %81
  %85 = vset.pattern.permute.xlu0 0
  %86 = vperm.xlu0 %85, %v48
  %v87 = vpop.permute.xlu0 %86
  %90 = vset.pattern.permute.xlu0 0
  %91 = vperm.xlu0 %90, %v49
  %v92 = vpop.permute.xlu0 %91
  %95 = vset.pattern.permute.xlu0 0
  %96 = vperm.xlu0 %95, %v50
  %v97 = vpop.permute.xlu0 %96
  %100 = vset.pattern.permute.xlu0 0
  %101 = vperm.xlu0 %100, %v51
  %v102 = vpop.permute.xlu0 %101
  %105 = vset.pattern.permute.xlu0 0
  %106 = vperm.xlu0 %105, %v52
  %v107 = vpop.permute.xlu0 %106
  %110 = vset.pattern.permute.xlu0 0
  %111 = vperm.xlu0 %110, %v53
  %v112 = vpop.permute.xlu0 %111
  %115 = vset.pattern.permute.xlu0 0
  %116 = vperm.xlu0 %115, %v54
  %v117 = vpop.permute.xlu0 %116
  %120 = vset.pattern.permute.xlu0 0
  %121 = vperm.xlu0 %120, %v55
  %v122 = vpop.permute.xlu0 %121
  %125 = vset.pattern.permute.xlu0 0
  %126 = vperm.xlu0 %125, %v56
  %v127 = vpop.permute.xlu0 %126
  %130 = vset.pattern.permute.xlu0 0
  %131 = vperm.xlu0 %130, %v57
  %v132 = vpop.permute.xlu0 %131
  %135 = vset.pattern.permute.xlu0 0
  %136 = vperm.xlu0 %135, %v58
  %v137 = vpop.permute.xlu0 %136
  %140 = vset.pattern.permute.xlu0 0
  %141 = vperm.xlu0 %140, %v59
  %v142 = vpop.permute.xlu0 %141
  %145 = vset.pattern.permute.xlu0 0
  %146 = vperm.xlu0 %145, %v60
  %v147 = vpop.permute.xlu0 %146
  %150 = vset.pattern.permute.xlu0 0
  %151 = vperm.xlu0 %150, %v61
  %v152 = vpop.permute.xlu0 %151
  %155 = vset.pattern.permute.xlu0 0
  %156 = vperm.xlu0 %155, %v62
  %v157 = vpop.permute.xlu0 %156
  %160 = vset.pattern.permute.xlu0 0
  %161 = vperm.xlu0 %160, %v63
  %v162 = vpop.permute.xlu0 %161
  %165 = vset.pattern.permute.xlu0 0
  %166 = vperm.xlu0 %165, %v64
  %v167 = vpop.permute.xlu0 %166
  %170 = vset.pattern.permute.xlu0 0
  %171 = vperm.xlu0 %170, %v65
  %v172 = vpop.permute.xlu0 %171
  %175 = vset.pattern.permute.xlu0 0
  %176 = vperm.xlu0 %175, %v66
  %v177 = vpop.permute.xlu0 %176
  %180 = vset.pattern.permute.xlu0 0
  %181 = vperm.xlu0 %180, %v67
  %v182 = vpop.permute.xlu0 %181
  %185 = vset.pattern.permute.xlu0 0
  %186 = vperm.xlu0 %185, %v68
  %v187 = vpop.permute.xlu0 %186
  %190 = vset.pattern.permute.xlu0 0
  %191 = vperm.xlu0 %190, %v69
  %v192 = vpop.permute.xlu0 %191
  %195 = vset.pattern.permute.xlu0 0
  %196 = vperm.xlu0 %195, %v70
  %v197 = vpop.permute.xlu0 %196
  %200 = vset.pattern.permute.xlu0 0
  %201 = vperm.xlu0 %200, %v71
  %v202 = vpop.permute.xlu0 %201
  %205 = vset.pattern.permute.xlu0 0
  %206 = vperm.xlu0 %205, %v72
  %v207 = vpop.permute.xlu0 %206
  %210 = vset.pattern.permute.xlu0 0
  %211 = vperm.xlu0 %210, %v73
  %v212 = vpop.permute.xlu0 %211
  %215 = vset.pattern.permute.xlu0 0
  %216 = vperm.xlu0 %215, %v74
  %v217 = vpop.permute.xlu0 %216
  %220 = vset.pattern.permute.xlu0 0
  %221 = vperm.xlu0 %220, %v75
  %v222 = vpop.permute.xlu0 %221
  %225 = vset.pattern.permute.xlu0 0
  %226 = vperm.xlu0 %225, %v76
  %v227 = vpop.permute.xlu0 %226
  %230 = vset.pattern.permute.xlu0 0
  %231 = vperm.xlu0 %230, %v77
  %v232 = vpop.permute.xlu0 %231
  %235 = vset.pattern.permute.xlu0 0
  %236 = vperm.xlu0 %235, %v78
  %v237 = vpop.permute.xlu0 %236
  %v239 = vmul.f32 %v15, %v82
  %v240 = vmul.f32 %v16, %v87
  %v241 = vmul.f32 %v17, %v92
  %v242 = vmul.f32 %v18, %v97
  %v243 = vmul.f32 %v19, %v102
  %v244 = vmul.f32 %v20, %v107
  %v245 = vmul.f32 %v21, %v112
  %v246 = vmul.f32 %v22, %v117
  %v247 = vmul.f32 %v23, %v122
  %v248 = vmul.f32 %v24, %v127
  %v249 = vmul.f32 %v25, %v132
  %v250 = vmul.f32 %v26, %v137
  %v251 = vmul.f32 %v27, %v142
  %v252 = vmul.f32 %v28, %v147
  %v253 = vmul.f32 %v29, %v152
  %v254 = vmul.f32 %v30, %v157
  %v255 = vmul.f32 %v31, %v162
  %v256 = vmul.f32 %v32, %v167
  %v257 = vmul.f32 %v33, %v172
  %v258 = vmul.f32 %v34, %v177
  %v259 = vmul.f32 %v35, %v182
  %v260 = vmul.f32 %v36, %v187
  %v261 = vmul.f32 %v37, %v192
  %v262 = vmul.f32 %v38, %v197
  %v263 = vmul.f32 %v39, %v202
  %v264 = vmul.f32 %v40, %v207
  %v265 = vmul.f32 %v41, %v212
  %v266 = vmul.f32 %v42, %v217
  %v267 = vmul.f32 %v43, %v222
  %v268 = vmul.f32 %v44, %v227
  %v269 = vmul.f32 %v45, %v232
  %v270 = vmul.f32 %v46, %v237
  %v271 = vpack.c.bf16 %v240, %v239
  %v272 = vpack.c.bf16 %v242, %v241
  %v273 = vpack.c.bf16 %v244, %v243
  %v274 = vpack.c.bf16 %v246, %v245
  %v275 = vpack.c.bf16 %v248, %v247
  %v276 = vpack.c.bf16 %v250, %v249
  %v277 = vpack.c.bf16 %v252, %v251
  %v278 = vpack.c.bf16 %v254, %v253
  %v279 = vpack.c.bf16 %v256, %v255
  %v280 = vpack.c.bf16 %v258, %v257
  %v281 = vpack.c.bf16 %v260, %v259
  %v282 = vpack.c.bf16 %v262, %v261
  %v283 = vpack.c.bf16 %v264, %v263
  %v284 = vpack.c.bf16 %v266, %v265
  %v285 = vpack.c.bf16 %v268, %v267
  %v286 = vpack.c.bf16 %v270, %v269
  %v287 = vld [vmem:[%s2] sm:$0xf]
  %v288 = vld [vmem:[%s2 + $0x4] sm:$0xf]
  %v289 = vld [vmem:[%s2 + $0x8] sm:$0xf]
  %v290 = vld [vmem:[%s2 + $0xc] sm:$0xf]
  %v291 = vld [vmem:[%s2 + $0x10] sm:$0xf]
  %v292 = vld [vmem:[%s2 + $0x14] sm:$0xf]
  %v293 = vld [vmem:[%s2 + $0x18] sm:$0xf]
  %v294 = vld [vmem:[%s2 + $0x1c] sm:$0xf]
  %v295 = vld [vmem:[%s2 + $0x20] sm:$0xf]
  %v296 = vld [vmem:[%s2 + $0x24] sm:$0xf]
  %v297 = vld [vmem:[%s2 + $0x28] sm:$0xf]
  %v298 = vld [vmem:[%s2 + $0x2c] sm:$0xf]
  %v299 = vld [vmem:[%s2 + $0x30] sm:$0xf]
  %v300 = vld [vmem:[%s2 + $0x34] sm:$0xf]
  %v301 = vld [vmem:[%s2 + $0x38] sm:$0xf]
  %v302 = vld [vmem:[%s2 + $0x3c] sm:$0xf]
  %v319 = vunpack.c.l.b16 %v287
  %v320 = vunpack.c.l.b16 %v288
  %v321 = vunpack.c.l.b16 %v289
  %v322 = vunpack.c.l.b16 %v290
  %v323 = vunpack.c.l.b16 %v291
  %v324 = vunpack.c.l.b16 %v292
  %v325 = vunpack.c.l.b16 %v293
  %v326 = vunpack.c.l.b16 %v294
  %v327 = vunpack.c.l.b16 %v295
  %v328 = vunpack.c.l.b16 %v296
  %v329 = vunpack.c.l.b16 %v297
  %v330 = vunpack.c.l.b16 %v298
  %v331 = vunpack.c.l.b16 %v299
  %v332 = vunpack.c.l.b16 %v300
  %v333 = vunpack.c.l.b16 %v301
  %v334 = vunpack.c.l.b16 %v302
  %v335 = vpack.c.b16 %v320, %v319
  %v336 = vpack.c.b16 %v322, %v321
  %v337 = vpack.c.b16 %v324, %v323
  %v338 = vpack.c.b16 %v326, %v325
  %v339 = vpack.c.b16 %v328, %v327
  %v340 = vpack.c.b16 %v330, %v329
  %v341 = vpack.c.b16 %v332, %v331
  %v342 = vpack.c.b16 %v334, %v333
  %351 = vmatprep.subr.bf16.mxu0 0
  %352 = vmatpush1.bf16.msra.mxu0 %v342
  %353 = vmatprep.subr.bf16.mxu0 0
  %354 = vmatpush1.bf16.msra.mxu0 %v341
  %355 = vmatprep.subr.bf16.mxu0 0
  %356 = vmatpush1.bf16.msra.mxu0 %v340
  %357 = vmatprep.subr.bf16.mxu0 0
  %358 = vmatpush1.bf16.msra.mxu0 %v339
  %359 = vmatprep.subr.bf16.mxu0 0
  %360 = vmatpush1.bf16.msra.mxu0 %v338
  %361 = vmatprep.subr.bf16.mxu0 0
  %362 = vmatpush1.bf16.msra.mxu0 %v337
  %363 = vmatprep.subr.bf16.mxu0 0
  %364 = vmatpush1.bf16.msra.mxu0 %v336
  %365 = vmatprep.subr.bf16.mxu0 0
  %366 = vmatpush1.bf16.msra.mxu0 %v335
  %367 = vmatprep.subr.bf16.mxu0 0
  %368 = vmatpush2.bf16.msra.mxu0 0
  %369 = vmatprep.subr.bf16.mxu0 0
  %370 = vmatpush2.bf16.msra.mxu0 0
  %371 = vmatprep.subr.bf16.mxu0 0
  %372 = vmatpush2.bf16.msra.mxu0 0
  %373 = vmatprep.subr.bf16.mxu0 0
  %374 = vmatpush2.bf16.msra.mxu0 0
  %375 = vmatprep.subr.bf16.mxu0 0
  %376 = vmatpush2.bf16.msra.mxu0 0
  %377 = vmatprep.subr.bf16.mxu0 0
  %378 = vmatpush2.bf16.msra.mxu0 0
  %379 = vmatprep.subr.bf16.mxu0 0
  %380 = vmatpush2.bf16.msra.mxu0 0
  %381 = vmatprep.subr.bf16.mxu0 0
  %382 = vmatpush2.bf16.msra.mxu0 0
  %383 = vmatprep.mubr.bf16.mxu0 0
  %384 = vmatmul.mubr.bf16.gmra.mxu0 %v271
  %v385 = vpop.f32.mrf.mxu0
  %v386 = vadd.f32 0.0, %v385
  %v387 = vpop.f32.mrf.mxu0
  %v388 = vpop.f32.mrf.mxu0
  %v389 = vadd.f32 0.0, %v388
  %v390 = vpop.f32.mrf.mxu0
  %391 = vmatprep.mubr.bf16.mxu0 0
  %392 = vmatmul.mubr.bf16.gmra.mxu0 %v272
  %v393 = vpop.f32.mrf.mxu0
  %v394 = vadd.f32 0.0, %v393
  %v395 = vpop.f32.mrf.mxu0
  %v396 = vpop.f32.mrf.mxu0
  %v397 = vadd.f32 0.0, %v396
  %v398 = vpop.f32.mrf.mxu0
  %399 = vmatprep.mubr.bf16.mxu0 0
  %400 = vmatmul.mubr.bf16.gmra.mxu0 %v273
  %v401 = vpop.f32.mrf.mxu0
  %v402 = vadd.f32 0.0, %v401
  %v403 = vpop.f32.mrf.mxu0
  %v404 = vpop.f32.mrf.mxu0
  %v405 = vadd.f32 0.0, %v404
  %v406 = vpop.f32.mrf.mxu0
  %407 = vmatprep.mubr.bf16.mxu0 0
  %408 = vmatmul.mubr.bf16.gmra.mxu0 %v274
  %v409 = vpop.f32.mrf.mxu0
  %v410 = vadd.f32 0.0, %v409
  %v411 = vpop.f32.mrf.mxu0
  %v412 = vpop.f32.mrf.mxu0
  %v413 = vadd.f32 0.0, %v412
  %v414 = vpop.f32.mrf.mxu0
  %415 = vmatprep.mubr.bf16.mxu0 0
  %416 = vmatmul.mubr.bf16.gmra.mxu0 %v275
  %v417 = vpop.f32.mrf.mxu0
  %v418 = vadd.f32 0.0, %v417
  %v419 = vpop.f32.mrf.mxu0
  %v420 = vpop.f32.mrf.mxu0
  %v421 = vadd.f32 0.0, %v420
  %v422 = vpop.f32.mrf.mxu0
  %423 = vmatprep.mubr.bf16.mxu0 0
  %424 = vmatmul.mubr.bf16.gmra.mxu0 %v276
  %v425 = vpop.f32.mrf.mxu0
  %v426 = vadd.f32 0.0, %v425
  %v427 = vpop.f32.mrf.mxu0
  %v428 = vpop.f32.mrf.mxu0
  %v429 = vadd.f32 0.0, %v428
  %v430 = vpop.f32.mrf.mxu0
  %431 = vmatprep.mubr.bf16.mxu0 0
  %432 = vmatmul.mubr.bf16.gmra.mxu0 %v277
  %v433 = vpop.f32.mrf.mxu0
  %v434 = vadd.f32 0.0, %v433
  %v435 = vpop.f32.mrf.mxu0
  %v436 = vpop.f32.mrf.mxu0
  %v437 = vadd.f32 0.0, %v436
  %v438 = vpop.f32.mrf.mxu0
  %439 = vmatprep.mubr.bf16.mxu0 0
  %440 = vmatmul.mubr.bf16.gmra.mxu0 %v278
  %v441 = vpop.f32.mrf.mxu0
  %v442 = vadd.f32 0.0, %v441
  %v443 = vpop.f32.mrf.mxu0
  %v444 = vpop.f32.mrf.mxu0
  %v445 = vadd.f32 0.0, %v444
  %v446 = vpop.f32.mrf.mxu0
  %447 = vmatprep.mubr.bf16.mxu0 0
  %448 = vmatmul.mubr.bf16.gmra.mxu0 %v279
  %v449 = vpop.f32.mrf.mxu0
  %v450 = vadd.f32 0.0, %v449
  %v451 = vpop.f32.mrf.mxu0
  %v452 = vpop.f32.mrf.mxu0
  %v453 = vadd.f32 0.0, %v452
  %v454 = vpop.f32.mrf.mxu0
  %455 = vmatprep.mubr.bf16.mxu0 0
  %456 = vmatmul.mubr.bf16.gmra.mxu0 %v280
  %v457 = vpop.f32.mrf.mxu0
  %v458 = vadd.f32 0.0, %v457
  %v459 = vpop.f32.mrf.mxu0
  %v460 = vpop.f32.mrf.mxu0
  %v461 = vadd.f32 0.0, %v460
  %v462 = vpop.f32.mrf.mxu0
  %463 = vmatprep.mubr.bf16.mxu0 0
  %464 = vmatmul.mubr.bf16.gmra.mxu0 %v281
  %v465 = vpop.f32.mrf.mxu0
  %v466 = vadd.f32 0.0, %v465
  %v467 = vpop.f32.mrf.mxu0
  %v468 = vpop.f32.mrf.mxu0
  %v469 = vadd.f32 0.0, %v468
  %v470 = vpop.f32.mrf.mxu0
  %471 = vmatprep.mubr.bf16.mxu0 0
  %472 = vmatmul.mubr.bf16.gmra.mxu0 %v282
  %v473 = vpop.f32.mrf.mxu0
  %v474 = vadd.f32 0.0, %v473
  %v475 = vpop.f32.mrf.mxu0
  %v476 = vpop.f32.mrf.mxu0
  %v477 = vadd.f32 0.0, %v476
  %v478 = vpop.f32.mrf.mxu0
  %479 = vmatprep.mubr.bf16.mxu0 0
  %480 = vmatmul.mubr.bf16.gmra.mxu0 %v283
  %v481 = vpop.f32.mrf.mxu0
  %v482 = vadd.f32 0.0, %v481
  %v483 = vpop.f32.mrf.mxu0
  %v484 = vpop.f32.mrf.mxu0
  %v485 = vadd.f32 0.0, %v484
  %v486 = vpop.f32.mrf.mxu0
  %487 = vmatprep.mubr.bf16.mxu0 0
  %488 = vmatmul.mubr.bf16.gmra.mxu0 %v284
  %v489 = vpop.f32.mrf.mxu0
  %v490 = vadd.f32 0.0, %v489
  %v491 = vpop.f32.mrf.mxu0
  %v492 = vpop.f32.mrf.mxu0
  %v493 = vadd.f32 0.0, %v492
  %v494 = vpop.f32.mrf.mxu0
  %495 = vmatprep.mubr.bf16.mxu0 0
  %496 = vmatmul.mubr.bf16.gmra.mxu0 %v285
  %v497 = vpop.f32.mrf.mxu0
  %v498 = vadd.f32 0.0, %v497
  %v499 = vpop.f32.mrf.mxu0
  %v500 = vpop.f32.mrf.mxu0
  %v501 = vadd.f32 0.0, %v500
  %v502 = vpop.f32.mrf.mxu0
  %503 = vmatprep.mubr.bf16.mxu0 0
  %504 = vmatmul.mubr.bf16.gmra.mxu0 %v286
  %v505 = vpop.f32.mrf.mxu0
  %v506 = vadd.f32 0.0, %v505
  %v507 = vpop.f32.mrf.mxu0
  %v508 = vpop.f32.mrf.mxu0
  %v509 = vadd.f32 0.0, %v508
  %v510 = vpop.f32.mrf.mxu0
  %511 = vdwg.mxu0
  %v512 = vpack.c.bf16 %v389, %v386
  %v513 = vpack.c.bf16 %v397, %v394
  %v514 = vpack.c.bf16 %v405, %v402
  %v515 = vpack.c.bf16 %v413, %v410
  %v516 = vpack.c.bf16 %v421, %v418
  %v517 = vpack.c.bf16 %v429, %v426
  %v518 = vpack.c.bf16 %v437, %v434
  %v519 = vpack.c.bf16 %v445, %v442
  %v520 = vpack.c.bf16 %v453, %v450
  %v521 = vpack.c.bf16 %v461, %v458
  %v522 = vpack.c.bf16 %v469, %v466
  %v523 = vpack.c.bf16 %v477, %v474
  %v524 = vpack.c.bf16 %v485, %v482
  %v525 = vpack.c.bf16 %v493, %v490
  %v526 = vpack.c.bf16 %v501, %v498
  %v527 = vpack.c.bf16 %v509, %v506
  %v544 = vunpack.c.l.b16 %v512
  %v545 = vunpack.c.h.b16 %v512
  %v546 = vunpack.c.l.b16 %v513
  %v547 = vunpack.c.h.b16 %v513
  %v548 = vunpack.c.l.b16 %v514
  %v549 = vunpack.c.h.b16 %v514
  %v550 = vunpack.c.l.b16 %v515
  %v551 = vunpack.c.h.b16 %v515
  %v552 = vunpack.c.l.b16 %v516
  %v553 = vunpack.c.h.b16 %v516
  %v554 = vunpack.c.l.b16 %v517
  %v555 = vunpack.c.h.b16 %v517
  %v556 = vunpack.c.l.b16 %v518
  %v557 = vunpack.c.h.b16 %v518
  %v558 = vunpack.c.l.b16 %v519
  %v559 = vunpack.c.h.b16 %v519
  %v560 = vunpack.c.l.b16 %v520
  %v561 = vunpack.c.h.b16 %v520
  %v562 = vunpack.c.l.b16 %v521
  %v563 = vunpack.c.h.b16 %v521
  %v564 = vunpack.c.l.b16 %v522
  %v565 = vunpack.c.h.b16 %v522
  %v566 = vunpack.c.l.b16 %v523
  %v567 = vunpack.c.h.b16 %v523
  %v568 = vunpack.c.l.b16 %v524
  %v569 = vunpack.c.h.b16 %v524
  %v570 = vunpack.c.l.b16 %v525
  %v571 = vunpack.c.h.b16 %v525
  %v572 = vunpack.c.l.b16 %v526
  %v573 = vunpack.c.h.b16 %v526
  %v574 = vunpack.c.l.b16 %v527
  %v575 = vunpack.c.h.b16 %v527
  %v576 = vpack.c.b16 %v544, %v544
  %v577 = vpack.c.b16 %v545, %v545
  %v578 = vpack.c.b16 %v546, %v546
  %v579 = vpack.c.b16 %v547, %v547
  %v580 = vpack.c.b16 %v548, %v548
  %v581 = vpack.c.b16 %v549, %v549
  %v582 = vpack.c.b16 %v550, %v550
  %v583 = vpack.c.b16 %v551, %v551
  %v584 = vpack.c.b16 %v552, %v552
  %v585 = vpack.c.b16 %v553, %v553
  %v586 = vpack.c.b16 %v554, %v554
  %v587 = vpack.c.b16 %v555, %v555
  %v588 = vpack.c.b16 %v556, %v556
  %v589 = vpack.c.b16 %v557, %v557
  %v590 = vpack.c.b16 %v558, %v558
  %v591 = vpack.c.b16 %v559, %v559
  %v592 = vpack.c.b16 %v560, %v560
  %v593 = vpack.c.b16 %v561, %v561
  %v594 = vpack.c.b16 %v562, %v562
  %v595 = vpack.c.b16 %v563, %v563
  %v596 = vpack.c.b16 %v564, %v564
  %v597 = vpack.c.b16 %v565, %v565
  %v598 = vpack.c.b16 %v566, %v566
  %v599 = vpack.c.b16 %v567, %v567
  %v600 = vpack.c.b16 %v568, %v568
  %v601 = vpack.c.b16 %v569, %v569
  %v602 = vpack.c.b16 %v570, %v570
  %v603 = vpack.c.b16 %v571, %v571
  %v604 = vpack.c.b16 %v572, %v572
  %v605 = vpack.c.b16 %v573, %v573
  %v606 = vpack.c.b16 %v574, %v574
  %v607 = vpack.c.b16 %v575, %v575
  %640 = vst [vmem:[%s3] sm:$0xf] %v576
  %641 = vst [vmem:[%s3 + $0x4] sm:$0xf] %v577
  %642 = vst [vmem:[%s3 + $0x8] sm:$0xf] %v578
  %643 = vst [vmem:[%s3 + $0xc] sm:$0xf] %v579
  %644 = vst [vmem:[%s3 + $0x10] sm:$0xf] %v580
  %645 = vst [vmem:[%s3 + $0x14] sm:$0xf] %v581
  %646 = vst [vmem:[%s3 + $0x18] sm:$0xf] %v582
  %647 = vst [vmem:[%s3 + $0x1c] sm:$0xf] %v583
  %648 = vst [vmem:[%s3 + $0x20] sm:$0xf] %v584
  %649 = vst [vmem:[%s3 + $0x24] sm:$0xf] %v585
  %650 = vst [vmem:[%s3 + $0x28] sm:$0xf] %v586
  %651 = vst [vmem:[%s3 + $0x2c] sm:$0xf] %v587
  %652 = vst [vmem:[%s3 + $0x30] sm:$0xf] %v588
  %653 = vst [vmem:[%s3 + $0x34] sm:$0xf] %v589
  %654 = vst [vmem:[%s3 + $0x38] sm:$0xf] %v590
  %655 = vst [vmem:[%s3 + $0x3c] sm:$0xf] %v591
  %656 = vst [vmem:[%s3 + $0x40] sm:$0xf] %v592
  %657 = vst [vmem:[%s3 + $0x44] sm:$0xf] %v593
  %658 = vst [vmem:[%s3 + $0x48] sm:$0xf] %v594
  %659 = vst [vmem:[%s3 + $0x4c] sm:$0xf] %v595
  %660 = vst [vmem:[%s3 + $0x50] sm:$0xf] %v596
  %661 = vst [vmem:[%s3 + $0x54] sm:$0xf] %v597
  %662 = vst [vmem:[%s3 + $0x58] sm:$0xf] %v598
  %663 = vst [vmem:[%s3 + $0x5c] sm:$0xf] %v599
  %664 = vst [vmem:[%s3 + $0x60] sm:$0xf] %v600
  %665 = vst [vmem:[%s3 + $0x64] sm:$0xf] %v601
  %666 = vst [vmem:[%s3 + $0x68] sm:$0xf] %v602
  %667 = vst [vmem:[%s3 + $0x6c] sm:$0xf] %v603
  %668 = vst [vmem:[%s3 + $0x70] sm:$0xf] %v604
  %669 = vst [vmem:[%s3 + $0x74] sm:$0xf] %v605
  %670 = vst [vmem:[%s3 + $0x78] sm:$0xf] %v606
  %671 = vst [vmem:[%s3 + $0x7c] sm:$0xf] %v607
  // Predicated region
  $region14: #{gcn_pny_forward.4} parent=0 // pred_check
    _
  $region15: #{gcn_pny_forward.4} parent=0 // pred_check_branch
    %673 = sbr.rel (0) target = $region17
  $region16: #{gcn_pny_forward.4} parent=0 // pred_region
    _
  $region17: #{gcn_pny_forward.4} parent=0 // pred_fallthru
    _
  // Predicated region
  $region18: #{gcn_pny_forward.4} parent=0 // pred_check
    _
  $region19: #{gcn_pny_forward.4} parent=0 // pred_check_branch
    %675 = sbr.rel (0) target = $region21
  $region20: #{gcn_pny_forward.4} parent=0 // pred_region
    _
  $region21: #{gcn_pny_forward.4} parent=0 // pred_fallthru
    _

// kernel: gcn_pny_forward.5
$region0: #{gcn_pny_forward.5}
  #allocation0 [shape = 'u32[]', space=smem, size = 0x4, offset = 0x4, fixed_abs, tag = 'smem constant byte address 0x4 - core index']
  #allocation1 [shape = 'u32[144,128]{1,0:T(1,128)}', space=vmem, size = 0x12000, scoped, tag = 'internal scratch']
  #allocation2 [shape = 'f32[128,128]{1,0:T(8,128)}', space=vmem, size = 0x10000, scoped, tag = 'scratch operand']
  %s0 = inlined_call_operand.vmem [shape: s8[256,256], index: 0, kind: input, shape index: {}]
  %s1 = inlined_call_operand.vmem [shape: bf16[256,128], index: 1, kind: input, shape index: {}]
  %s2 = inlined_call_operand.vmem [shape: f32[1,128], index: 2, kind: input, shape index: {}]
  %s3 = inlined_call_operand.vmem [shape: bf16[256,128], index: 3, kind: output, shape index: {}]
  %s4 = sld [smem:[#allocation0]]
  $region57: #{gcn_pny_forward.5} parent=0
    _
  %s6 = ssub.s32 1, %s4
  %s7 = scalar_select 0, %s6, %s4
  loop: start=0, step=1, limit=4
  $region2: #{gcn_pny_forward.5} parent=0 // loop_pre_header
    _
  $region3: #{gcn_pny_forward.5} parent=0 // loop_header
    %s9 = sphi 0, %s13
    %p10 = scmp.ge.s32.totalorder %s9, 4
    %s16 = sphi 0, %s28
    %s17 = sphi 0, %s24
    %s18 = sphi 0, %s16
    %s19 = sphi 0, %s17
    %s20 = sphi 0, %s18
    %s21 = sphi 0, %s19
    %s33 = sphi 0, %s35
    %s36 = sphi 0, %s33
    %s37 = sphi 0, %s36
    %s53 = sphi 0, %s37
    %s57 = sphi 0, %s57
    %s59 = sphi 0, %s57
    %s60 = sphi 0, %s59
    %s74 = sphi 0, %s60
    %s78 = sphi 0, %s78
    %s80 = sphi 0, %s78
    %s81 = sphi 0, %s80
    %s95 = sphi 0, %s81
    %s101 = sphi 0, %s103
    %s104 = sphi 0, %s101
    %s105 = sphi 0, %s104
    %s121 = sphi 0, %s105
  $region4: #{gcn_pny_forward.5} parent=0 // loop_header_branch
    %12 = sbr.rel (%p10) target = $region8
  $region5: #{gcn_pny_forward.5} parent=0 // loop_body
    %s14 = ssub.s32 %s9, 1
    %s15 = ssub.s32 %s9, 2
    %s22 = sadd.s32 1, %s17
    %p23 = scmp.ge.s32.totalorder %s22, 1
    %s24 = scalar_select %p23, 0, %s22
    %s25 = sadd.s32 1, %s16
    %s26 = scalar_select %p23, %s25, %s16
    %p27 = scmp.ge.s32.totalorder %s26, 2
    %s28 = scalar_select %p27, 0, %s26
    %s29 = ssub.s32 %s16, %s28
    %s30 = ssub.s32 %s17, %s24
    %s31 = sor.u32 %s29, %s30
    %p32 = scmp.eq.s32.totalorder %s31, 0
    %s34 = sadd.s32 %s33, 1
    %s35 = scalar_select %p32, %s33, %s34
    %p38 = pneg %p32
    %p39 = scmp.eq.s32.totalorder %s9, 1
    %p40 = por %p38, %p39
    %p41 = scmp.ne.s32.totalorder %s33, %s36
    %p42 = scmp.eq.s32.totalorder %s9, 0
    %p43 = por %p41, %p42
    %p44 = scmp.ne.s32.totalorder %s33, %s36
    %p45 = scmp.eq.s32.totalorder %s14, 1
    %p46 = por %p44, %p45
    %p47 = scmp.ne.s32.totalorder %s36, %s37
    %p48 = scmp.eq.s32.totalorder %s14, 0
    %p49 = por %p47, %p48
    %p50 = scmp.ne.s32.totalorder %s36, %s37
    %p51 = scmp.eq.s32.totalorder %s15, 1
    %p52 = por %p50, %p51
    %p54 = scmp.ne.s32.totalorder %s37, %s53
    %p55 = scmp.eq.s32.totalorder %s15, 0
    %p56 = por %p54, %p55
    %s58 = sadd.s32 %s57, 1
    %p61 = scmp.eq.s32.totalorder %s9, 1
    %p62 = scmp.ne.s32.totalorder %s57, %s59
    %p63 = scmp.eq.s32.totalorder %s9, 0
    %p64 = por %p62, %p63
    %p65 = scmp.ne.s32.totalorder %s57, %s59
    %p66 = scmp.eq.s32.totalorder %s14, 1
    %p67 = por %p65, %p66
    %p68 = scmp.ne.s32.totalorder %s59, %s60
    %p69 = scmp.eq.s32.totalorder %s14, 0
    %p70 = por %p68, %p69
    %p71 = scmp.ne.s32.totalorder %s59, %s60
    %p72 = scmp.eq.s32.totalorder %s15, 1
    %p73 = por %p71, %p72
    %p75 = scmp.ne.s32.totalorder %s60, %s74
    %p76 = scmp.eq.s32.totalorder %s15, 0
    %p77 = por %p75, %p76
    %s79 = sadd.s32 %s78, 1
    %p82 = scmp.eq.s32.totalorder %s9, 1
    %p83 = scmp.ne.s32.totalorder %s78, %s80
    %p84 = scmp.eq.s32.totalorder %s9, 0
    %p85 = por %p83, %p84
    %p86 = scmp.ne.s32.totalorder %s78, %s80
    %p87 = scmp.eq.s32.totalorder %s14, 1
    %p88 = por %p86, %p87
    %p89 = scmp.ne.s32.totalorder %s80, %s81
    %p90 = scmp.eq.s32.totalorder %s14, 0
    %p91 = por %p89, %p90
    %p92 = scmp.ne.s32.totalorder %s80, %s81
    %p93 = scmp.eq.s32.totalorder %s15, 1
    %p94 = por %p92, %p93
    %p96 = scmp.ne.s32.totalorder %s81, %s95
    %p97 = scmp.eq.s32.totalorder %s15, 0
    %p98 = por %p96, %p97
    %s99 = ssub.s32 %s16, %s28
    %p100 = scmp.eq.s32.totalorder %s99, 0
    %s102 = sadd.s32 %s101, 1
    %s103 = scalar_select %p100, %s101, %s102
    %p106 = pneg %p100
    %p107 = scmp.eq.s32.totalorder %s9, 1
    %p108 = por %p106, %p107
    %p109 = scmp.ne.s32.totalorder %s101, %s104
    %p110 = scmp.eq.s32.totalorder %s9, 0
    %p111 = por %p109, %p110
    %p112 = scmp.ne.s32.totalorder %s101, %s104
    %p113 = scmp.eq.s32.totalorder %s14, 1
    %p114 = por %p112, %p113
    %p115 = scmp.ne.s32.totalorder %s104, %s105
    %p116 = scmp.eq.s32.totalorder %s14, 0
    %p117 = por %p115, %p116
    %p118 = scmp.ne.s32.totalorder %s104, %s105
    %p119 = scmp.eq.s32.totalorder %s15, 1
    %p120 = por %p118, %p119
    %p122 = scmp.ne.s32.totalorder %s105, %s121
    %p123 = scmp.eq.s32.totalorder %s15, 0
    %p124 = por %p122, %p123
    %p125 = scmp.le.s32.totalorder 1, %s9
    %p126 = scmp.lt.s32.totalorder %s9, 3
    %p127 = pnand %p125, %p126
    %p128 = pneg %p127
    // Predicated region
    $region9: #{gcn_pny_forward.5} parent=5 // pred_check
      _
    $region10: #{gcn_pny_forward.5} parent=5 // pred_check_branch
      %130 = sbr.rel (%p127) target = $region12
    $region11: #{gcn_pny_forward.5} parent=5 // pred_region
      %s131 = ssub.s32 %s9, 1
      // Predicated region
      $region13: #{gcn_pny_forward.5} parent=11 // pred_check
        %p132 = pneg %p70
      $region14: #{gcn_pny_forward.5} parent=11 // pred_check_branch
        %134 = sbr.rel (%p132) target = $region16
      $region15: #{gcn_pny_forward.5} parent=11 // pred_region
        _
      $region16: #{gcn_pny_forward.5} parent=11 // pred_fallthru
        _
      // Predicated region
      $region17: #{gcn_pny_forward.5} parent=11 // pred_check
        %p135 = pneg %p91
      $region18: #{gcn_pny_forward.5} parent=11 // pred_check_branch
        %137 = sbr.rel (%p135) target = $region20
      $region19: #{gcn_pny_forward.5} parent=11 // pred_region
        _
      $region20: #{gcn_pny_forward.5} parent=11 // pred_fallthru
        _
    $region12: #{gcn_pny_forward.5} parent=5 // pred_fallthru
      _
    %p138 = scmp.lt.s32.totalorder %s9, 2
    // Predicated region
    $region21: #{gcn_pny_forward.5} parent=5 // pred_check
      %p139 = pneg %p138
    $region22: #{gcn_pny_forward.5} parent=5 // pred_check_branch
      %141 = sbr.rel (%p139) target = $region24
    $region23: #{gcn_pny_forward.5} parent=5 // pred_region
      // Predicated region
      $region25: #{gcn_pny_forward.5} parent=23 // pred_check
        %p142 = pneg %p43
      $region26: #{gcn_pny_forward.5} parent=23 // pred_check_branch
        %144 = sbr.rel (%p142) target = $region28
      $region27: #{gcn_pny_forward.5} parent=23 // pred_region
        %s145 = smul.u32 4, %s16
        %s146 = smul.u32 2, %s17
        %p147 = scmp.lt.s32.totalorder %s145, 7
        %s148 = scalar_select %p147, %s145, 7
        %p149 = scmp.lt.s32.totalorder %s146, 1
        %s150 = scalar_select %p149, %s146, 1
        %s151 = smul.addr %s148, 2
        %s152 = sadd.s32 %s150, %s151
        %s153 = smul.addr %s152, 8
        %s154 = scalar_lea.vmem %s0, %s153
        %s155 = smul.u32 4, %s16
        %s156 = smul.u32 2, %s17
      $region28: #{gcn_pny_forward.5} parent=23 // pred_fallthru
        _
    $region24: #{gcn_pny_forward.5} parent=5 // pred_fallthru
      _
    %p157 = scmp.le.s32.totalorder 1, %s9
    %p158 = scmp.lt.s32.totalorder %s9, 3
    %p159 = pnand %p157, %p158
    %p160 = pneg %p159
    // Predicated region
    $region29: #{gcn_pny_forward.5} parent=5 // pred_check
      _
    $region30: #{gcn_pny_forward.5} parent=5 // pred_check_branch
      %162 = sbr.rel (%p159) target = $region32
    $region31: #{gcn_pny_forward.5} parent=5 // pred_region
      %s163 = ssub.s32 %s9, 1
      %s164 = smul.u32 4, %s18
      %s165 = smul.u32 2, %s19
      %p166 = scmp.lt.s32.totalorder %s164, 7
      %s167 = scalar_select %p166, %s164, 7
      %p168 = scmp.lt.s32.totalorder %s165, 1
      %s169 = scalar_select %p168, %s165, 1
      %s170 = smul.addr %s167, 2
      %s171 = sadd.s32 %s169, %s170
      %s172 = smul.addr %s171, 8
      %s173 = scalar_lea.vmem %s0, %s172
      %p174 = pneg %p49
      %p175 = pneg %p46
      %p176 = pneg %p70
      %p177 = pneg %p67
      %p178 = pneg %p91
      %p179 = pneg %p88
      %p180 = pneg %p117
      %p181 = pneg %p114
      %s182 = smul.u32 16, %s18
      %p183 = scmp.lt.s32.totalorder %s182, 31
      %s184 = scalar_select %p183, %s182, 31
      %s185 = smul.addr %s184, 4
      %s186 = scalar_lea.vmem %s3, %s185
      %s187 = smul.u32 4, %s18
      %s188 = smul.u32 2, %s19
      %p189 = scmp.lt.s32.totalorder %s187, 7
      %s190 = scalar_select %p189, %s187, 7
      %p191 = scmp.lt.s32.totalorder %s188, 1
      %s192 = scalar_select %p191, %s188, 1
      %s193 = smul.addr %s190, 2
      %s194 = sadd.s32 %s192, %s193
      %s195 = smul.addr %s194, 8
      %s196 = scalar_lea.vmem %s0, %s195
      %s197 = smul.u32 4, %s18
      %s198 = smul.u32 2, %s19
      %s199 = smul.u32 16, %s18
      %p200 = scmp.lt.s32.totalorder %s199, 31
      %s201 = scalar_select %p200, %s199, 31
      %s202 = smul.addr %s201, 4
      %s203 = scalar_lea.vmem %s3, %s202
      %s204 = smul.u32 16, %s18
      %v206 = vld [vmem:[%s196] sm:$0xff]
      %v207 = vld [vmem:[%s196 + $0x8] sm:$0xff]
      %v208 = vld [vmem:[%s196 + $0x10] sm:$0xff]
      %v209 = vld [vmem:[%s196 + $0x18] sm:$0xff]
      %v210 = vld [vmem:[%s196 + $0x20] sm:$0xff]
      %v211 = vld [vmem:[%s196 + $0x28] sm:$0xff]
      %v212 = vld [vmem:[%s196 + $0x30] sm:$0xff]
      %v213 = vld [vmem:[%s196 + $0x38] sm:$0xff]
      %v214 = vunpack.c.l.s8.bf16 %v206
      %v215 = vunpack.c.l.s8.bf16 %v207
      %v216 = vunpack.c.h.s8.bf16 %v206
      %v217 = vunpack.c.h.s8.bf16 %v207
      %v218 = vunpack.c.l.s8.bf16 %v208
      %v219 = vunpack.c.l.s8.bf16 %v209
      %v220 = vunpack.c.h.s8.bf16 %v208
      %v221 = vunpack.c.h.s8.bf16 %v209
      %v222 = vunpack.c.l.s8.bf16 %v210
      %v223 = vunpack.c.l.s8.bf16 %v211
      %v224 = vunpack.c.h.s8.bf16 %v210
      %v225 = vunpack.c.h.s8.bf16 %v211
      %v226 = vunpack.c.l.s8.bf16 %v212
      %v227 = vunpack.c.l.s8.bf16 %v213
      %v228 = vunpack.c.h.s8.bf16 %v212
      %v229 = vunpack.c.h.s8.bf16 %v213
      %s230 = smul.u32 %s19, 256
      %s231 = sshra.s32 %s230, 3
      %s232 = sand.u32 %s230, 7
      %s233 = smul.addr %s231, 4
      %s234 = scalar_lea.vmem %s1, %s233
      %v235 = vld [vmem:[%s234] sm:$0xf]
      %v236 = vld [vmem:[%s234 + $0x4] sm:$0xf]
      %v237 = vld [vmem:[%s234 + $0x8] sm:$0xf]
      %v238 = vld [vmem:[%s234 + $0xc] sm:$0xf]
      %v239 = vld [vmem:[%s234 + $0x10] sm:$0xf]
      %v240 = vld [vmem:[%s234 + $0x14] sm:$0xf]
      %v241 = vld [vmem:[%s234 + $0x18] sm:$0xf]
      %v242 = vld [vmem:[%s234 + $0x1c] sm:$0xf]
      %v243 = vld [vmem:[%s234 + $0x20] sm:$0xf]
      %v244 = vld [vmem:[%s234 + $0x24] sm:$0xf]
      %v245 = vld [vmem:[%s234 + $0x28] sm:$0xf]
      %v246 = vld [vmem:[%s234 + $0x2c] sm:$0xf]
      %v247 = vld [vmem:[%s234 + $0x30] sm:$0xf]
      %v248 = vld [vmem:[%s234 + $0x34] sm:$0xf]
      %v249 = vld [vmem:[%s234 + $0x38] sm:$0xf]
      %v250 = vld [vmem:[%s234 + $0x3c] sm:$0xf]
      %v251 = vld [vmem:[%s234 + $0x40] sm:$0xf]
      %v252 = vld [vmem:[%s234 + $0x44] sm:$0xf]
      %v253 = vld [vmem:[%s234 + $0x48] sm:$0xf]
      %v254 = vld [vmem:[%s234 + $0x4c] sm:$0xf]
      %v255 = vld [vmem:[%s234 + $0x50] sm:$0xf]
      %v256 = vld [vmem:[%s234 + $0x54] sm:$0xf]
      %v257 = vld [vmem:[%s234 + $0x58] sm:$0xf]
      %v258 = vld [vmem:[%s234 + $0x5c] sm:$0xf]
      %v259 = vld [vmem:[%s234 + $0x60] sm:$0xf]
      %v260 = vld [vmem:[%s234 + $0x64] sm:$0xf]
      %v261 = vld [vmem:[%s234 + $0x68] sm:$0xf]
      %v262 = vld [vmem:[%s234 + $0x6c] sm:$0xf]
      %v263 = vld [vmem:[%s234 + $0x70] sm:$0xf]
      %v264 = vld [vmem:[%s234 + $0x74] sm:$0xf]
      %v265 = vld [vmem:[%s234 + $0x78] sm:$0xf]
      %v266 = vld [vmem:[%s234 + $0x7c] sm:$0xf]
      %v299 = vunpack.c.l.b16 %v235
      %v300 = vunpack.c.l.b16 %v236
      %v301 = vunpack.c.l.b16 %v237
      %v302 = vunpack.c.l.b16 %v238
      %v303 = vunpack.c.l.b16 %v239
      %v304 = vunpack.c.l.b16 %v240
      %v305 = vunpack.c.l.b16 %v241
      %v306 = vunpack.c.l.b16 %v242
      %v307 = vunpack.c.l.b16 %v243
      %v308 = vunpack.c.l.b16 %v244
      %v309 = vunpack.c.l.b16 %v245
      %v310 = vunpack.c.l.b16 %v246
      %v311 = vunpack.c.l.b16 %v247
      %v312 = vunpack.c.l.b16 %v248
      %v313 = vunpack.c.l.b16 %v249
      %v314 = vunpack.c.l.b16 %v250
      %v315 = vunpack.c.l.b16 %v251
      %v316 = vunpack.c.l.b16 %v252
      %v317 = vunpack.c.l.b16 %v253
      %v318 = vunpack.c.l.b16 %v254
      %v319 = vunpack.c.l.b16 %v255
      %v320 = vunpack.c.l.b16 %v256
      %v321 = vunpack.c.l.b16 %v257
      %v322 = vunpack.c.l.b16 %v258
      %v323 = vunpack.c.l.b16 %v259
      %v324 = vunpack.c.l.b16 %v260
      %v325 = vunpack.c.l.b16 %v261
      %v326 = vunpack.c.l.b16 %v262
      %v327 = vunpack.c.l.b16 %v263
      %v328 = vunpack.c.l.b16 %v264
      %v329 = vunpack.c.l.b16 %v265
      %v330 = vunpack.c.l.b16 %v266
      %v331 = vpack.c.b16 %v300, %v299
      %v332 = vpack.c.b16 %v302, %v301
      %v333 = vpack.c.b16 %v304, %v303
      %v334 = vpack.c.b16 %v306, %v305
      %v335 = vpack.c.b16 %v308, %v307
      %v336 = vpack.c.b16 %v310, %v309
      %v337 = vpack.c.b16 %v312, %v311
      %v338 = vpack.c.b16 %v314, %v313
      %v339 = vpack.c.b16 %v316, %v315
      %v340 = vpack.c.b16 %v318, %v317
      %v341 = vpack.c.b16 %v320, %v319
      %v342 = vpack.c.b16 %v322, %v321
      %v343 = vpack.c.b16 %v324, %v323
      %v344 = vpack.c.b16 %v326, %v325
      %v345 = vpack.c.b16 %v328, %v327
      %v346 = vpack.c.b16 %v330, %v329
      %363 = vmatprep.subr.bf16.mxu0 0
      %364 = vmatpush1.bf16.msra.mxu0 %v338
      %365 = vmatprep.subr.bf16.mxu0 0
      %366 = vmatpush1.bf16.msra.mxu0 %v337
      %367 = vmatprep.subr.bf16.mxu0 0
      %368 = vmatpush1.bf16.msra.mxu0 %v336
      %369 = vmatprep.subr.bf16.mxu0 0
      %370 = vmatpush1.bf16.msra.mxu0 %v335
      %371 = vmatprep.subr.bf16.mxu0 0
      %372 = vmatpush1.bf16.msra.mxu0 %v334
      %373 = vmatprep.subr.bf16.mxu0 0
      %374 = vmatpush1.bf16.msra.mxu0 %v333
      %375 = vmatprep.subr.bf16.mxu0 0
      %376 = vmatpush1.bf16.msra.mxu0 %v332
      %377 = vmatprep.subr.bf16.mxu0 0
      %378 = vmatpush1.bf16.msra.mxu0 %v331
      %379 = vmatprep.subr.bf16.mxu0 0
      %380 = vmatpush2.bf16.msra.mxu0 %v346
      %381 = vmatprep.subr.bf16.mxu0 0
      %382 = vmatpush2.bf16.msra.mxu0 %v345
      %383 = vmatprep.subr.bf16.mxu0 0
      %384 = vmatpush2.bf16.msra.mxu0 %v344
      %385 = vmatprep.subr.bf16.mxu0 0
      %386 = vmatpush2.bf16.msra.mxu0 %v343
      %387 = vmatprep.subr.bf16.mxu0 0
      %388 = vmatpush2.bf16.msra.mxu0 %v342
      %389 = vmatprep.subr.bf16.mxu0 0
      %390 = vmatpush2.bf16.msra.mxu0 %v341
      %391 = vmatprep.subr.bf16.mxu0 0
      %392 = vmatpush2.bf16.msra.mxu0 %v340
      %393 = vmatprep.subr.bf16.mxu0 0
      %394 = vmatpush2.bf16.msra.mxu0 %v339
      %395 = vmatprep.mubr.bf16.mxu0 %v215
      %396 = vmatmul.mubr.bf16.gmra.mxu0 %v214
      %v397 = vpop.f32.mrf.mxu0
      %v398 = vadd.f32 0.0, %v397
      %v399 = vpop.f32.mrf.mxu0
      %v400 = vpop.f32.mrf.mxu0
      %v401 = vadd.f32 0.0, %v400
      %v402 = vpop.f32.mrf.mxu0
      %403 = vmatprep.mubr.bf16.mxu0 %v217
      %404 = vmatmul.mubr.bf16.gmra.mxu0 %v216
      %v405 = vpop.f32.mrf.mxu0
      %v406 = vadd.f32 0.0, %v405
      %v407 = vpop.f32.mrf.mxu0
      %v408 = vpop.f32.mrf.mxu0
      %v409 = vadd.f32 0.0, %v408
      %v410 = vpop.f32.mrf.mxu0
      %411 = vmatprep.mubr.bf16.mxu0 %v219
      %412 = vmatmul.mubr.bf16.gmra.mxu0 %v218
      %v413 = vpop.f32.mrf.mxu0
      %v414 = vadd.f32 0.0, %v413
      %v415 = vpop.f32.mrf.mxu0
      %v416 = vpop.f32.mrf.mxu0
      %v417 = vadd.f32 0.0, %v416
      %v418 = vpop.f32.mrf.mxu0
      %419 = vmatprep.mubr.bf16.mxu0 %v221
      %420 = vmatmul.mubr.bf16.gmra.mxu0 %v220
      %v421 = vpop.f32.mrf.mxu0
      %v422 = vadd.f32 0.0, %v421
      %v423 = vpop.f32.mrf.mxu0
      %v424 = vpop.f32.mrf.mxu0
      %v425 = vadd.f32 0.0, %v424
      %v426 = vpop.f32.mrf.mxu0
      %427 = vmatprep.mubr.bf16.mxu0 %v223
      %428 = vmatmul.mubr.bf16.gmra.mxu0 %v222
      %v429 = vpop.f32.mrf.mxu0
      %v430 = vadd.f32 0.0, %v429
      %v431 = vpop.f32.mrf.mxu0
      %v432 = vpop.f32.mrf.mxu0
      %v433 = vadd.f32 0.0, %v432
      %v434 = vpop.f32.mrf.mxu0
      %435 = vmatprep.mubr.bf16.mxu0 %v225
      %436 = vmatmul.mubr.bf16.gmra.mxu0 %v224
      %v437 = vpop.f32.mrf.mxu0
      %v438 = vadd.f32 0.0, %v437
      %v439 = vpop.f32.mrf.mxu0
      %v440 = vpop.f32.mrf.mxu0
      %v441 = vadd.f32 0.0, %v440
      %v442 = vpop.f32.mrf.mxu0
      %443 = vmatprep.mubr.bf16.mxu0 %v227
      %444 = vmatmul.mubr.bf16.gmra.mxu0 %v226
      %v445 = vpop.f32.mrf.mxu0
      %v446 = vadd.f32 0.0, %v445
      %v447 = vpop.f32.mrf.mxu0
      %v448 = vpop.f32.mrf.mxu0
      %v449 = vadd.f32 0.0, %v448
      %v450 = vpop.f32.mrf.mxu0
      %451 = vmatprep.mubr.bf16.mxu0 %v229
      %452 = vmatmul.mubr.bf16.gmra.mxu0 %v228
      %v453 = vpop.f32.mrf.mxu0
      %v454 = vadd.f32 0.0, %v453
      %v455 = vpop.f32.mrf.mxu0
      %v456 = vpop.f32.mrf.mxu0
      %v457 = vadd.f32 0.0, %v456
      %v458 = vpop.f32.mrf.mxu0
      %459 = vdwg.mxu0
      %p460 = scmp.eq.s32.totalorder %s19, 0
      // Predicated region
      $region33: #{gcn_pny_forward.5} parent=31 // pred_check
        %p461 = pneg %p460
      $region34: #{gcn_pny_forward.5} parent=31 // pred_check_branch
        %463 = sbr.rel (%p461) target = $region36
      $region35: #{gcn_pny_forward.5} parent=31 // pred_region
        %464 = vst [vmem:[#allocation2] sm:$0xff] %v398
        %465 = vst [vmem:[#allocation2 + $0x8] sm:$0xff] %v401
        %466 = vst [vmem:[#allocation2 + $0x10] sm:$0xff] %v406
        %467 = vst [vmem:[#allocation2 + $0x18] sm:$0xff] %v409
        %468 = vst [vmem:[#allocation2 + $0x20] sm:$0xff] %v414
        %469 = vst [vmem:[#allocation2 + $0x28] sm:$0xff] %v417
        %470 = vst [vmem:[#allocation2 + $0x30] sm:$0xff] %v422
        %471 = vst [vmem:[#allocation2 + $0x38] sm:$0xff] %v425
        %472 = vst [vmem:[#allocation2 + $0x40] sm:$0xff] %v430
        %473 = vst [vmem:[#allocation2 + $0x48] sm:$0xff] %v433
        %474 = vst [vmem:[#allocation2 + $0x50] sm:$0xff] %v438
        %475 = vst [vmem:[#allocation2 + $0x58] sm:$0xff] %v441
        %476 = vst [vmem:[#allocation2 + $0x60] sm:$0xff] %v446
        %477 = vst [vmem:[#allocation2 + $0x68] sm:$0xff] %v449
        %478 = vst [vmem:[#allocation2 + $0x70] sm:$0xff] %v454
        %479 = vst [vmem:[#allocation2 + $0x78] sm:$0xff] %v457
      $region36: #{gcn_pny_forward.5} parent=31 // pred_fallthru
        _
      %p480 = scmp.gt.s32.totalorder %s19, 0
      // Predicated region
      $region37: #{gcn_pny_forward.5} parent=31 // pred_check
        %p481 = pneg %p480
      $region38: #{gcn_pny_forward.5} parent=31 // pred_check_branch
        %483 = sbr.rel (%p481) target = $region40
      $region39: #{gcn_pny_forward.5} parent=31 // pred_region
        %v484 = vld [vmem:[#allocation2] sm:$0xff]
        %v485 = vld [vmem:[#allocation2 + $0x8] sm:$0xff]
        %v486 = vld [vmem:[#allocation2 + $0x10] sm:$0xff]
        %v487 = vld [vmem:[#allocation2 + $0x18] sm:$0xff]
        %v488 = vld [vmem:[#allocation2 + $0x20] sm:$0xff]
        %v489 = vld [vmem:[#allocation2 + $0x28] sm:$0xff]
        %v490 = vld [vmem:[#allocation2 + $0x30] sm:$0xff]
        %v491 = vld [vmem:[#allocation2 + $0x38] sm:$0xff]
        %v492 = vld [vmem:[#allocation2 + $0x40] sm:$0xff]
        %v493 = vld [vmem:[#allocation2 + $0x48] sm:$0xff]
        %v494 = vld [vmem:[#allocation2 + $0x50] sm:$0xff]
        %v495 = vld [vmem:[#allocation2 + $0x58] sm:$0xff]
        %v496 = vld [vmem:[#allocation2 + $0x60] sm:$0xff]
        %v497 = vld [vmem:[#allocation2 + $0x68] sm:$0xff]
        %v498 = vld [vmem:[#allocation2 + $0x70] sm:$0xff]
        %v499 = vld [vmem:[#allocation2 + $0x78] sm:$0xff]
        %v500 = vadd.f32 %v484, %v398
        %v501 = vadd.f32 %v485, %v401
        %v502 = vadd.f32 %v486, %v406
        %v503 = vadd.f32 %v487, %v409
        %v504 = vadd.f32 %v488, %v414
        %v505 = vadd.f32 %v489, %v417
        %v506 = vadd.f32 %v490, %v422
        %v507 = vadd.f32 %v491, %v425
        %v508 = vadd.f32 %v492, %v430
        %v509 = vadd.f32 %v493, %v433
        %v510 = vadd.f32 %v494, %v438
        %v511 = vadd.f32 %v495, %v441
        %v512 = vadd.f32 %v496, %v446
        %v513 = vadd.f32 %v497, %v449
        %v514 = vadd.f32 %v498, %v454
        %v515 = vadd.f32 %v499, %v457
        %516 = vst [vmem:[#allocation2] sm:$0xff] %v500
        %517 = vst [vmem:[#allocation2 + $0x8] sm:$0xff] %v501
        %518 = vst [vmem:[#allocation2 + $0x10] sm:$0xff] %v502
        %519 = vst [vmem:[#allocation2 + $0x18] sm:$0xff] %v503
        %520 = vst [vmem:[#allocation2 + $0x20] sm:$0xff] %v504
        %521 = vst [vmem:[#allocation2 + $0x28] sm:$0xff] %v505
        %522 = vst [vmem:[#allocation2 + $0x30] sm:$0xff] %v506
        %523 = vst [vmem:[#allocation2 + $0x38] sm:$0xff] %v507
        %524 = vst [vmem:[#allocation2 + $0x40] sm:$0xff] %v508
        %525 = vst [vmem:[#allocation2 + $0x48] sm:$0xff] %v509
        %526 = vst [vmem:[#allocation2 + $0x50] sm:$0xff] %v510
        %527 = vst [vmem:[#allocation2 + $0x58] sm:$0xff] %v511
        %528 = vst [vmem:[#allocation2 + $0x60] sm:$0xff] %v512
        %529 = vst [vmem:[#allocation2 + $0x68] sm:$0xff] %v513
        %530 = vst [vmem:[#allocation2 + $0x70] sm:$0xff] %v514
        %531 = vst [vmem:[#allocation2 + $0x78] sm:$0xff] %v515
      $region40: #{gcn_pny_forward.5} parent=31 // pred_fallthru
        _
      // Predicated region
      $region41: #{gcn_pny_forward.5} parent=31 // pred_check
        %p532 = pneg %p460
      $region42: #{gcn_pny_forward.5} parent=31 // pred_check_branch
        %534 = sbr.rel (%p532) target = $region44
      $region43: #{gcn_pny_forward.5} parent=31 // pred_region
        %v535 = vld [vmem:[#allocation2] sm:$0xff]
        %v536 = vld [vmem:[#allocation2 + $0x8] sm:$0xff]
        %v537 = vld [vmem:[#allocation2 + $0x10] sm:$0xff]
        %v538 = vld [vmem:[#allocation2 + $0x18] sm:$0xff]
        %v539 = vld [vmem:[#allocation2 + $0x20] sm:$0xff]
        %v540 = vld [vmem:[#allocation2 + $0x28] sm:$0xff]
        %v541 = vld [vmem:[#allocation2 + $0x30] sm:$0xff]
        %v542 = vld [vmem:[#allocation2 + $0x38] sm:$0xff]
        %v543 = vld [vmem:[#allocation2 + $0x40] sm:$0xff]
        %v544 = vld [vmem:[#allocation2 + $0x48] sm:$0xff]
        %v545 = vld [vmem:[#allocation2 + $0x50] sm:$0xff]
        %v546 = vld [vmem:[#allocation2 + $0x58] sm:$0xff]
        %v547 = vld [vmem:[#allocation2 + $0x60] sm:$0xff]
        %v548 = vld [vmem:[#allocation2 + $0x68] sm:$0xff]
        %v549 = vld [vmem:[#allocation2 + $0x70] sm:$0xff]
        %v550 = vld [vmem:[#allocation2 + $0x78] sm:$0xff]
        %v551 = vld [vmem:[%s2] sm:$0x1]
        %v553 = vlaneseq
        %v554 = vshrl.u32 %v553, 7
        %v555 = vsub.s32 0, %v554
        %v556 = vrot.slane %v551, %v555
        %v558 = vadd.f32 %v535, %v556
        %v559 = vadd.f32 %v536, %v556
        %v560 = vadd.f32 %v537, %v556
        %v561 = vadd.f32 %v538, %v556
        %v562 = vadd.f32 %v539, %v556
        %v563 = vadd.f32 %v540, %v556
        %v564 = vadd.f32 %v541, %v556
        %v565 = vadd.f32 %v542, %v556
        %v566 = vadd.f32 %v543, %v556
        %v567 = vadd.f32 %v544, %v556
        %v568 = vadd.f32 %v545, %v556
        %v569 = vadd.f32 %v546, %v556
        %v570 = vadd.f32 %v547, %v556
        %v571 = vadd.f32 %v548, %v556
        %v572 = vadd.f32 %v549, %v556
        %v573 = vadd.f32 %v550, %v556
        %v574 = vmax.f32 %v558, 0.0
        %v575 = vmax.f32 %v559, 0.0
        %v576 = vmax.f32 %v560, 0.0
        %v577 = vmax.f32 %v561, 0.0
        %v578 = vmax.f32 %v562, 0.0
        %v579 = vmax.f32 %v563, 0.0
        %v580 = vmax.f32 %v564, 0.0
        %v581 = vmax.f32 %v565, 0.0
        %v582 = vmax.f32 %v566, 0.0
        %v583 = vmax.f32 %v567, 0.0
        %v584 = vmax.f32 %v568, 0.0
        %v585 = vmax.f32 %v569, 0.0
        %v586 = vmax.f32 %v570, 0.0
        %v587 = vmax.f32 %v571, 0.0
        %v588 = vmax.f32 %v572, 0.0
        %v589 = vmax.f32 %v573, 0.0
        %v590 = vpack.c.bf16 %v575, %v574
        %v591 = vpack.c.bf16 %v577, %v576
        %v592 = vpack.c.bf16 %v579, %v578
        %v593 = vpack.c.bf16 %v581, %v580
        %v594 = vpack.c.bf16 %v583, %v582
        %v595 = vpack.c.bf16 %v585, %v584
        %v596 = vpack.c.bf16 %v587, %v586
        %v597 = vpack.c.bf16 %v589, %v588
        %v606 = vunpack.c.l.b16 %v590
        %v607 = vunpack.c.h.b16 %v590
        %v608 = vunpack.c.l.b16 %v591
        %v609 = vunpack.c.h.b16 %v591
        %v610 = vunpack.c.l.b16 %v592
        %v611 = vunpack.c.h.b16 %v592
        %v612 = vunpack.c.l.b16 %v593
        %v613 = vunpack.c.h.b16 %v593
        %v614 = vunpack.c.l.b16 %v594
        %v615 = vunpack.c.h.b16 %v594
        %v616 = vunpack.c.l.b16 %v595
        %v617 = vunpack.c.h.b16 %v595
        %v618 = vunpack.c.l.b16 %v596
        %v619 = vunpack.c.h.b16 %v596
        %v620 = vunpack.c.l.b16 %v597
        %v621 = vunpack.c.h.b16 %v597
        %v622 = vpack.c.b16 %v606, %v606
        %v623 = vpack.c.b16 %v607, %v607
        %v624 = vpack.c.b16 %v608, %v608
        %v625 = vpack.c.b16 %v609, %v609
        %v626 = vpack.c.b16 %v610, %v610
        %v627 = vpack.c.b16 %v611, %v611
        %v628 = vpack.c.b16 %v612, %v612
        %v629 = vpack.c.b16 %v613, %v613
        %v630 = vpack.c.b16 %v614, %v614
        %v631 = vpack.c.b16 %v615, %v615
        %v632 = vpack.c.b16 %v616, %v616
        %v633 = vpack.c.b16 %v617, %v617
        %v634 = vpack.c.b16 %v618, %v618
        %v635 = vpack.c.b16 %v619, %v619
        %v636 = vpack.c.b16 %v620, %v620
        %v637 = vpack.c.b16 %v621, %v621
        %654 = vst [vmem:[%s203] sm:$0xf] %v622
        %655 = vst [vmem:[%s203 + $0x4] sm:$0xf] %v623
        %656 = vst [vmem:[%s203 + $0x8] sm:$0xf] %v624
        %657 = vst [vmem:[%s203 + $0xc] sm:$0xf] %v625
        %658 = vst [vmem:[%s203 + $0x10] sm:$0xf] %v626
        %659 = vst [vmem:[%s203 + $0x14] sm:$0xf] %v627
        %660 = vst [vmem:[%s203 + $0x18] sm:$0xf] %v628
        %661 = vst [vmem:[%s203 + $0x1c] sm:$0xf] %v629
        %662 = vst [vmem:[%s203 + $0x20] sm:$0xf] %v630
        %663 = vst [vmem:[%s203 + $0x24] sm:$0xf] %v631
        %664 = vst [vmem:[%s203 + $0x28] sm:$0xf] %v632
        %665 = vst [vmem:[%s203 + $0x2c] sm:$0xf] %v633
        %666 = vst [vmem:[%s203 + $0x30] sm:$0xf] %v634
        %667 = vst [vmem:[%s203 + $0x34] sm:$0xf] %v635
        %668 = vst [vmem:[%s203 + $0x38] sm:$0xf] %v636
        %669 = vst [vmem:[%s203 + $0x3c] sm:$0xf] %v637
      $region44: #{gcn_pny_forward.5} parent=31 // pred_fallthru
        _
      %s670 = smul.u32 16, %s18
      %p671 = scmp.lt.s32.totalorder %s670, 31
      %s672 = scalar_select %p671, %s670, 31
      %s673 = smul.addr %s672, 4
      %s674 = scalar_lea.vmem %s3, %s673
      // Predicated region
      $region45: #{gcn_pny_forward.5} parent=31 // pred_check
        %p675 = pneg %p114
      $region46: #{gcn_pny_forward.5} parent=31 // pred_check_branch
        %677 = sbr.rel (%p675) target = $region48
      $region47: #{gcn_pny_forward.5} parent=31 // pred_region
        %s678 = smul.u32 16, %s18
      $region48: #{gcn_pny_forward.5} parent=31 // pred_fallthru
        _
    $region32: #{gcn_pny_forward.5} parent=5 // pred_fallthru
      _
    %p679 = scmp.le.s32.totalorder 2, %s9
    // Predicated region
    $region49: #{gcn_pny_forward.5} parent=5 // pred_check
      %p680 = pneg %p679
    $region50: #{gcn_pny_forward.5} parent=5 // pred_check_branch
      %682 = sbr.rel (%p680) target = $region52
    $region51: #{gcn_pny_forward.5} parent=5 // pred_region
      %s683 = ssub.s32 %s9, 2
      // Predicated region
      $region53: #{gcn_pny_forward.5} parent=51 // pred_check
        %p684 = pneg %p120
      $region54: #{gcn_pny_forward.5} parent=51 // pred_check_branch
        %686 = sbr.rel (%p684) target = $region56
      $region55: #{gcn_pny_forward.5} parent=51 // pred_region
        %s687 = smul.u32 16, %s20
        %p688 = scmp.lt.s32.totalorder %s687, 31
        %s689 = scalar_select %p688, %s687, 31
        %s690 = smul.addr %s689, 4
        %s691 = scalar_lea.vmem %s3, %s690
      $region56: #{gcn_pny_forward.5} parent=51 // pred_fallthru
        _
    $region52: #{gcn_pny_forward.5} parent=5 // pred_fallthru
      _
  $region6: #{gcn_pny_forward.5} parent=0 // loop_footer
    %s13 = sadd.s32 1, %s9
  $region7: #{gcn_pny_forward.5} parent=0 // loop_footer_branch
    %8 = sbr.rel target = $region3
  $region8: #{gcn_pny_forward.5} parent=0 // loop_exit
    _

// kernel: gcn_pny_forward.7
$region0: #{gcn_pny_forward.7}
  #allocation0 [shape = 'u32[]', space=smem, size = 0x4, offset = 0x4, fixed_abs, tag = 'smem constant byte address 0x4 - core index']
  #allocation1 [shape = 'u32[144,128]{1,0:T(1,128)}', space=vmem, size = 0x12000, scoped, tag = 'internal scratch']
  #allocation2 [shape = 'f32[128,128]{1,0:T(8,128)}', space=vmem, size = 0x10000, scoped, tag = 'scratch operand']
  %s0 = inlined_call_operand.vmem [shape: s8[256,256], index: 0, kind: input, shape index: {}]
  %s1 = inlined_call_operand.vmem [shape: bf16[256,128], index: 1, kind: input, shape index: {}]
  %s2 = inlined_call_operand.vmem [shape: f32[1,128], index: 2, kind: input, shape index: {}]
  %s3 = inlined_call_operand.vmem [shape: f32[256,128], index: 3, kind: output, shape index: {}]
  %s4 = sld [smem:[#allocation0]]
  $region57: #{gcn_pny_forward.7} parent=0
    _
  %s6 = ssub.s32 1, %s4
  %s7 = scalar_select 0, %s6, %s4
  loop: start=0, step=1, limit=4
  $region2: #{gcn_pny_forward.7} parent=0 // loop_pre_header
    _
  $region3: #{gcn_pny_forward.7} parent=0 // loop_header
    %s9 = sphi 0, %s13
    %p10 = scmp.ge.s32.totalorder %s9, 4
    %s16 = sphi 0, %s28
    %s17 = sphi 0, %s24
    %s18 = sphi 0, %s16
    %s19 = sphi 0, %s17
    %s20 = sphi 0, %s18
    %s21 = sphi 0, %s19
    %s33 = sphi 0, %s35
    %s36 = sphi 0, %s33
    %s37 = sphi 0, %s36
    %s53 = sphi 0, %s37
    %s57 = sphi 0, %s57
    %s59 = sphi 0, %s57
    %s60 = sphi 0, %s59
    %s74 = sphi 0, %s60
    %s78 = sphi 0, %s78
    %s80 = sphi 0, %s78
    %s81 = sphi 0, %s80
    %s95 = sphi 0, %s81
    %s101 = sphi 0, %s103
    %s104 = sphi 0, %s101
    %s105 = sphi 0, %s104
    %s121 = sphi 0, %s105
  $region4: #{gcn_pny_forward.7} parent=0 // loop_header_branch
    %12 = sbr.rel (%p10) target = $region8
  $region5: #{gcn_pny_forward.7} parent=0 // loop_body
    %s14 = ssub.s32 %s9, 1
    %s15 = ssub.s32 %s9, 2
    %s22 = sadd.s32 1, %s17
    %p23 = scmp.ge.s32.totalorder %s22, 1
    %s24 = scalar_select %p23, 0, %s22
    %s25 = sadd.s32 1, %s16
    %s26 = scalar_select %p23, %s25, %s16
    %p27 = scmp.ge.s32.totalorder %s26, 2
    %s28 = scalar_select %p27, 0, %s26
    %s29 = ssub.s32 %s16, %s28
    %s30 = ssub.s32 %s17, %s24
    %s31 = sor.u32 %s29, %s30
    %p32 = scmp.eq.s32.totalorder %s31, 0
    %s34 = sadd.s32 %s33, 1
    %s35 = scalar_select %p32, %s33, %s34
    %p38 = pneg %p32
    %p39 = scmp.eq.s32.totalorder %s9, 1
    %p40 = por %p38, %p39
    %p41 = scmp.ne.s32.totalorder %s33, %s36
    %p42 = scmp.eq.s32.totalorder %s9, 0
    %p43 = por %p41, %p42
    %p44 = scmp.ne.s32.totalorder %s33, %s36
    %p45 = scmp.eq.s32.totalorder %s14, 1
    %p46 = por %p44, %p45
    %p47 = scmp.ne.s32.totalorder %s36, %s37
    %p48 = scmp.eq.s32.totalorder %s14, 0
    %p49 = por %p47, %p48
    %p50 = scmp.ne.s32.totalorder %s36, %s37
    %p51 = scmp.eq.s32.totalorder %s15, 1
    %p52 = por %p50, %p51
    %p54 = scmp.ne.s32.totalorder %s37, %s53
    %p55 = scmp.eq.s32.totalorder %s15, 0
    %p56 = por %p54, %p55
    %s58 = sadd.s32 %s57, 1
    %p61 = scmp.eq.s32.totalorder %s9, 1
    %p62 = scmp.ne.s32.totalorder %s57, %s59
    %p63 = scmp.eq.s32.totalorder %s9, 0
    %p64 = por %p62, %p63
    %p65 = scmp.ne.s32.totalorder %s57, %s59
    %p66 = scmp.eq.s32.totalorder %s14, 1
    %p67 = por %p65, %p66
    %p68 = scmp.ne.s32.totalorder %s59, %s60
    %p69 = scmp.eq.s32.totalorder %s14, 0
    %p70 = por %p68, %p69
    %p71 = scmp.ne.s32.totalorder %s59, %s60
    %p72 = scmp.eq.s32.totalorder %s15, 1
    %p73 = por %p71, %p72
    %p75 = scmp.ne.s32.totalorder %s60, %s74
    %p76 = scmp.eq.s32.totalorder %s15, 0
    %p77 = por %p75, %p76
    %s79 = sadd.s32 %s78, 1
    %p82 = scmp.eq.s32.totalorder %s9, 1
    %p83 = scmp.ne.s32.totalorder %s78, %s80
    %p84 = scmp.eq.s32.totalorder %s9, 0
    %p85 = por %p83, %p84
    %p86 = scmp.ne.s32.totalorder %s78, %s80
    %p87 = scmp.eq.s32.totalorder %s14, 1
    %p88 = por %p86, %p87
    %p89 = scmp.ne.s32.totalorder %s80, %s81
    %p90 = scmp.eq.s32.totalorder %s14, 0
    %p91 = por %p89, %p90
    %p92 = scmp.ne.s32.totalorder %s80, %s81
    %p93 = scmp.eq.s32.totalorder %s15, 1
    %p94 = por %p92, %p93
    %p96 = scmp.ne.s32.totalorder %s81, %s95
    %p97 = scmp.eq.s32.totalorder %s15, 0
    %p98 = por %p96, %p97
    %s99 = ssub.s32 %s16, %s28
    %p100 = scmp.eq.s32.totalorder %s99, 0
    %s102 = sadd.s32 %s101, 1
    %s103 = scalar_select %p100, %s101, %s102
    %p106 = pneg %p100
    %p107 = scmp.eq.s32.totalorder %s9, 1
    %p108 = por %p106, %p107
    %p109 = scmp.ne.s32.totalorder %s101, %s104
    %p110 = scmp.eq.s32.totalorder %s9, 0
    %p111 = por %p109, %p110
    %p112 = scmp.ne.s32.totalorder %s101, %s104
    %p113 = scmp.eq.s32.totalorder %s14, 1
    %p114 = por %p112, %p113
    %p115 = scmp.ne.s32.totalorder %s104, %s105
    %p116 = scmp.eq.s32.totalorder %s14, 0
    %p117 = por %p115, %p116
    %p118 = scmp.ne.s32.totalorder %s104, %s105
    %p119 = scmp.eq.s32.totalorder %s15, 1
    %p120 = por %p118, %p119
    %p122 = scmp.ne.s32.totalorder %s105, %s121
    %p123 = scmp.eq.s32.totalorder %s15, 0
    %p124 = por %p122, %p123
    %p125 = scmp.le.s32.totalorder 1, %s9
    %p126 = scmp.lt.s32.totalorder %s9, 3
    %p127 = pnand %p125, %p126
    %p128 = pneg %p127
    // Predicated region
    $region9: #{gcn_pny_forward.7} parent=5 // pred_check
      _
    $region10: #{gcn_pny_forward.7} parent=5 // pred_check_branch
      %130 = sbr.rel (%p127) target = $region12
    $region11: #{gcn_pny_forward.7} parent=5 // pred_region
      %s131 = ssub.s32 %s9, 1
      // Predicated region
      $region13: #{gcn_pny_forward.7} parent=11 // pred_check
        %p132 = pneg %p70
      $region14: #{gcn_pny_forward.7} parent=11 // pred_check_branch
        %134 = sbr.rel (%p132) target = $region16
      $region15: #{gcn_pny_forward.7} parent=11 // pred_region
        _
      $region16: #{gcn_pny_forward.7} parent=11 // pred_fallthru
        _
      // Predicated region
      $region17: #{gcn_pny_forward.7} parent=11 // pred_check
        %p135 = pneg %p91
      $region18: #{gcn_pny_forward.7} parent=11 // pred_check_branch
        %137 = sbr.rel (%p135) target = $region20
      $region19: #{gcn_pny_forward.7} parent=11 // pred_region
        _
      $region20: #{gcn_pny_forward.7} parent=11 // pred_fallthru
        _
    $region12: #{gcn_pny_forward.7} parent=5 // pred_fallthru
      _
    %p138 = scmp.lt.s32.totalorder %s9, 2
    // Predicated region
    $region21: #{gcn_pny_forward.7} parent=5 // pred_check
      %p139 = pneg %p138
    $region22: #{gcn_pny_forward.7} parent=5 // pred_check_branch
      %141 = sbr.rel (%p139) target = $region24
    $region23: #{gcn_pny_forward.7} parent=5 // pred_region
      // Predicated region
      $region25: #{gcn_pny_forward.7} parent=23 // pred_check
        %p142 = pneg %p43
      $region26: #{gcn_pny_forward.7} parent=23 // pred_check_branch
        %144 = sbr.rel (%p142) target = $region28
      $region27: #{gcn_pny_forward.7} parent=23 // pred_region
        %s145 = smul.u32 4, %s16
        %s146 = smul.u32 2, %s17
        %p147 = scmp.lt.s32.totalorder %s145, 7
        %s148 = scalar_select %p147, %s145, 7
        %p149 = scmp.lt.s32.totalorder %s146, 1
        %s150 = scalar_select %p149, %s146, 1
        %s151 = smul.addr %s148, 2
        %s152 = sadd.s32 %s150, %s151
        %s153 = smul.addr %s152, 8
        %s154 = scalar_lea.vmem %s0, %s153
        %s155 = smul.u32 4, %s16
        %s156 = smul.u32 2, %s17
      $region28: #{gcn_pny_forward.7} parent=23 // pred_fallthru
        _
    $region24: #{gcn_pny_forward.7} parent=5 // pred_fallthru
      _
    %p157 = scmp.le.s32.totalorder 1, %s9
    %p158 = scmp.lt.s32.totalorder %s9, 3
    %p159 = pnand %p157, %p158
    %p160 = pneg %p159
    // Predicated region
    $region29: #{gcn_pny_forward.7} parent=5 // pred_check
      _
    $region30: #{gcn_pny_forward.7} parent=5 // pred_check_branch
      %162 = sbr.rel (%p159) target = $region32
    $region31: #{gcn_pny_forward.7} parent=5 // pred_region
      %s163 = ssub.s32 %s9, 1
      %s164 = smul.u32 4, %s18
      %s165 = smul.u32 2, %s19
      %p166 = scmp.lt.s32.totalorder %s164, 7
      %s167 = scalar_select %p166, %s164, 7
      %p168 = scmp.lt.s32.totalorder %s165, 1
      %s169 = scalar_select %p168, %s165, 1
      %s170 = smul.addr %s167, 2
      %s171 = sadd.s32 %s169, %s170
      %s172 = smul.addr %s171, 8
      %s173 = scalar_lea.vmem %s0, %s172
      %p174 = pneg %p49
      %p175 = pneg %p46
      %p176 = pneg %p70
      %p177 = pneg %p67
      %p178 = pneg %p91
      %p179 = pneg %p88
      %p180 = pneg %p117
      %p181 = pneg %p114
      %s182 = smul.u32 16, %s18
      %p183 = scmp.lt.s32.totalorder %s182, 31
      %s184 = scalar_select %p183, %s182, 31
      %s185 = smul.addr %s184, 8
      %s186 = scalar_lea.vmem %s3, %s185
      %s187 = smul.u32 4, %s18
      %s188 = smul.u32 2, %s19
      %p189 = scmp.lt.s32.totalorder %s187, 7
      %s190 = scalar_select %p189, %s187, 7
      %p191 = scmp.lt.s32.totalorder %s188, 1
      %s192 = scalar_select %p191, %s188, 1
      %s193 = smul.addr %s190, 2
      %s194 = sadd.s32 %s192, %s193
      %s195 = smul.addr %s194, 8
      %s196 = scalar_lea.vmem %s0, %s195
      %s197 = smul.u32 4, %s18
      %s198 = smul.u32 2, %s19
      %s199 = smul.u32 16, %s18
      %p200 = scmp.lt.s32.totalorder %s199, 31
      %s201 = scalar_select %p200, %s199, 31
      %s202 = smul.addr %s201, 8
      %s203 = scalar_lea.vmem %s3, %s202
      %s204 = smul.u32 16, %s18
      %v206 = vld [vmem:[%s196] sm:$0xff]
      %v207 = vld [vmem:[%s196 + $0x8] sm:$0xff]
      %v208 = vld [vmem:[%s196 + $0x10] sm:$0xff]
      %v209 = vld [vmem:[%s196 + $0x18] sm:$0xff]
      %v210 = vld [vmem:[%s196 + $0x20] sm:$0xff]
      %v211 = vld [vmem:[%s196 + $0x28] sm:$0xff]
      %v212 = vld [vmem:[%s196 + $0x30] sm:$0xff]
      %v213 = vld [vmem:[%s196 + $0x38] sm:$0xff]
      %v214 = vunpack.c.l.s8.bf16 %v206
      %v215 = vunpack.c.l.s8.bf16 %v207
      %v216 = vunpack.c.h.s8.bf16 %v206
      %v217 = vunpack.c.h.s8.bf16 %v207
      %v218 = vunpack.c.l.s8.bf16 %v208
      %v219 = vunpack.c.l.s8.bf16 %v209
      %v220 = vunpack.c.h.s8.bf16 %v208
      %v221 = vunpack.c.h.s8.bf16 %v209
      %v222 = vunpack.c.l.s8.bf16 %v210
      %v223 = vunpack.c.l.s8.bf16 %v211
      %v224 = vunpack.c.h.s8.bf16 %v210
      %v225 = vunpack.c.h.s8.bf16 %v211
      %v226 = vunpack.c.l.s8.bf16 %v212
      %v227 = vunpack.c.l.s8.bf16 %v213
      %v228 = vunpack.c.h.s8.bf16 %v212
      %v229 = vunpack.c.h.s8.bf16 %v213
      %s230 = smul.u32 %s19, 256
      %s231 = sshra.s32 %s230, 3
      %s232 = sand.u32 %s230, 7
      %s233 = smul.addr %s231, 4
      %s234 = scalar_lea.vmem %s1, %s233
      %v235 = vld [vmem:[%s234] sm:$0xf]
      %v236 = vld [vmem:[%s234 + $0x4] sm:$0xf]
      %v237 = vld [vmem:[%s234 + $0x8] sm:$0xf]
      %v238 = vld [vmem:[%s234 + $0xc] sm:$0xf]
      %v239 = vld [vmem:[%s234 + $0x10] sm:$0xf]
      %v240 = vld [vmem:[%s234 + $0x14] sm:$0xf]
      %v241 = vld [vmem:[%s234 + $0x18] sm:$0xf]
      %v242 = vld [vmem:[%s234 + $0x1c] sm:$0xf]
      %v243 = vld [vmem:[%s234 + $0x20] sm:$0xf]
      %v244 = vld [vmem:[%s234 + $0x24] sm:$0xf]
      %v245 = vld [vmem:[%s234 + $0x28] sm:$0xf]
      %v246 = vld [vmem:[%s234 + $0x2c] sm:$0xf]
      %v247 = vld [vmem:[%s234 + $0x30] sm:$0xf]
      %v248 = vld [vmem:[%s234 + $0x34] sm:$0xf]
      %v249 = vld [vmem:[%s234 + $0x38] sm:$0xf]
      %v250 = vld [vmem:[%s234 + $0x3c] sm:$0xf]
      %v251 = vld [vmem:[%s234 + $0x40] sm:$0xf]
      %v252 = vld [vmem:[%s234 + $0x44] sm:$0xf]
      %v253 = vld [vmem:[%s234 + $0x48] sm:$0xf]
      %v254 = vld [vmem:[%s234 + $0x4c] sm:$0xf]
      %v255 = vld [vmem:[%s234 + $0x50] sm:$0xf]
      %v256 = vld [vmem:[%s234 + $0x54] sm:$0xf]
      %v257 = vld [vmem:[%s234 + $0x58] sm:$0xf]
      %v258 = vld [vmem:[%s234 + $0x5c] sm:$0xf]
      %v259 = vld [vmem:[%s234 + $0x60] sm:$0xf]
      %v260 = vld [vmem:[%s234 + $0x64] sm:$0xf]
      %v261 = vld [vmem:[%s234 + $0x68] sm:$0xf]
      %v262 = vld [vmem:[%s234 + $0x6c] sm:$0xf]
      %v263 = vld [vmem:[%s234 + $0x70] sm:$0xf]
      %v264 = vld [vmem:[%s234 + $0x74] sm:$0xf]
      %v265 = vld [vmem:[%s234 + $0x78] sm:$0xf]
      %v266 = vld [vmem:[%s234 + $0x7c] sm:$0xf]
      %v299 = vunpack.c.l.b16 %v235
      %v300 = vunpack.c.l.b16 %v236
      %v301 = vunpack.c.l.b16 %v237
      %v302 = vunpack.c.l.b16 %v238
      %v303 = vunpack.c.l.b16 %v239
      %v304 = vunpack.c.l.b16 %v240
      %v305 = vunpack.c.l.b16 %v241
      %v306 = vunpack.c.l.b16 %v242
      %v307 = vunpack.c.l.b16 %v243
      %v308 = vunpack.c.l.b16 %v244
      %v309 = vunpack.c.l.b16 %v245
      %v310 = vunpack.c.l.b16 %v246
      %v311 = vunpack.c.l.b16 %v247
      %v312 = vunpack.c.l.b16 %v248
      %v313 = vunpack.c.l.b16 %v249
      %v314 = vunpack.c.l.b16 %v250
      %v315 = vunpack.c.l.b16 %v251
      %v316 = vunpack.c.l.b16 %v252
      %v317 = vunpack.c.l.b16 %v253
      %v318 = vunpack.c.l.b16 %v254
      %v319 = vunpack.c.l.b16 %v255
      %v320 = vunpack.c.l.b16 %v256
      %v321 = vunpack.c.l.b16 %v257
      %v322 = vunpack.c.l.b16 %v258
      %v323 = vunpack.c.l.b16 %v259
      %v324 = vunpack.c.l.b16 %v260
      %v325 = vunpack.c.l.b16 %v261
      %v326 = vunpack.c.l.b16 %v262
      %v327 = vunpack.c.l.b16 %v263
      %v328 = vunpack.c.l.b16 %v264
      %v329 = vunpack.c.l.b16 %v265
      %v330 = vunpack.c.l.b16 %v266
      %v331 = vpack.c.b16 %v300, %v299
      %v332 = vpack.c.b16 %v302, %v301
      %v333 = vpack.c.b16 %v304, %v303
      %v334 = vpack.c.b16 %v306, %v305
      %v335 = vpack.c.b16 %v308, %v307
      %v336 = vpack.c.b16 %v310, %v309
      %v337 = vpack.c.b16 %v312, %v311
      %v338 = vpack.c.b16 %v314, %v313
      %v339 = vpack.c.b16 %v316, %v315
      %v340 = vpack.c.b16 %v318, %v317
      %v341 = vpack.c.b16 %v320, %v319
      %v342 = vpack.c.b16 %v322, %v321
      %v343 = vpack.c.b16 %v324, %v323
      %v344 = vpack.c.b16 %v326, %v325
      %v345 = vpack.c.b16 %v328, %v327
      %v346 = vpack.c.b16 %v330, %v329
      %363 = vmatprep.subr.bf16.mxu0 0
      %364 = vmatpush1.bf16.msra.mxu0 %v338
      %365 = vmatprep.subr.bf16.mxu0 0
      %366 = vmatpush1.bf16.msra.mxu0 %v337
      %367 = vmatprep.subr.bf16.mxu0 0
      %368 = vmatpush1.bf16.msra.mxu0 %v336
      %369 = vmatprep.subr.bf16.mxu0 0
      %370 = vmatpush1.bf16.msra.mxu0 %v335
      %371 = vmatprep.subr.bf16.mxu0 0
      %372 = vmatpush1.bf16.msra.mxu0 %v334
      %373 = vmatprep.subr.bf16.mxu0 0
      %374 = vmatpush1.bf16.msra.mxu0 %v333
      %375 = vmatprep.subr.bf16.mxu0 0
      %376 = vmatpush1.bf16.msra.mxu0 %v332
      %377 = vmatprep.subr.bf16.mxu0 0
      %378 = vmatpush1.bf16.msra.mxu0 %v331
      %379 = vmatprep.subr.bf16.mxu0 0
      %380 = vmatpush2.bf16.msra.mxu0 %v346
      %381 = vmatprep.subr.bf16.mxu0 0
      %382 = vmatpush2.bf16.msra.mxu0 %v345
      %383 = vmatprep.subr.bf16.mxu0 0
      %384 = vmatpush2.bf16.msra.mxu0 %v344
      %385 = vmatprep.subr.bf16.mxu0 0
      %386 = vmatpush2.bf16.msra.mxu0 %v343
      %387 = vmatprep.subr.bf16.mxu0 0
      %388 = vmatpush2.bf16.msra.mxu0 %v342
      %389 = vmatprep.subr.bf16.mxu0 0
      %390 = vmatpush2.bf16.msra.mxu0 %v341
      %391 = vmatprep.subr.bf16.mxu0 0
      %392 = vmatpush2.bf16.msra.mxu0 %v340
      %393 = vmatprep.subr.bf16.mxu0 0
      %394 = vmatpush2.bf16.msra.mxu0 %v339
      %395 = vmatprep.mubr.bf16.mxu0 %v215
      %396 = vmatmul.mubr.bf16.gmra.mxu0 %v214
      %v397 = vpop.f32.mrf.mxu0
      %v398 = vadd.f32 0.0, %v397
      %v399 = vpop.f32.mrf.mxu0
      %v400 = vpop.f32.mrf.mxu0
      %v401 = vadd.f32 0.0, %v400
      %v402 = vpop.f32.mrf.mxu0
      %403 = vmatprep.mubr.bf16.mxu0 %v217
      %404 = vmatmul.mubr.bf16.gmra.mxu0 %v216
      %v405 = vpop.f32.mrf.mxu0
      %v406 = vadd.f32 0.0, %v405
      %v407 = vpop.f32.mrf.mxu0
      %v408 = vpop.f32.mrf.mxu0
      %v409 = vadd.f32 0.0, %v408
      %v410 = vpop.f32.mrf.mxu0
      %411 = vmatprep.mubr.bf16.mxu0 %v219
      %412 = vmatmul.mubr.bf16.gmra.mxu0 %v218
      %v413 = vpop.f32.mrf.mxu0
      %v414 = vadd.f32 0.0, %v413
      %v415 = vpop.f32.mrf.mxu0
      %v416 = vpop.f32.mrf.mxu0
      %v417 = vadd.f32 0.0, %v416
      %v418 = vpop.f32.mrf.mxu0
      %419 = vmatprep.mubr.bf16.mxu0 %v221
      %420 = vmatmul.mubr.bf16.gmra.mxu0 %v220
      %v421 = vpop.f32.mrf.mxu0
      %v422 = vadd.f32 0.0, %v421
      %v423 = vpop.f32.mrf.mxu0
      %v424 = vpop.f32.mrf.mxu0
      %v425 = vadd.f32 0.0, %v424
      %v426 = vpop.f32.mrf.mxu0
      %427 = vmatprep.mubr.bf16.mxu0 %v223
      %428 = vmatmul.mubr.bf16.gmra.mxu0 %v222
      %v429 = vpop.f32.mrf.mxu0
      %v430 = vadd.f32 0.0, %v429
      %v431 = vpop.f32.mrf.mxu0
      %v432 = vpop.f32.mrf.mxu0
      %v433 = vadd.f32 0.0, %v432
      %v434 = vpop.f32.mrf.mxu0
      %435 = vmatprep.mubr.bf16.mxu0 %v225
      %436 = vmatmul.mubr.bf16.gmra.mxu0 %v224
      %v437 = vpop.f32.mrf.mxu0
      %v438 = vadd.f32 0.0, %v437
      %v439 = vpop.f32.mrf.mxu0
      %v440 = vpop.f32.mrf.mxu0
      %v441 = vadd.f32 0.0, %v440
      %v442 = vpop.f32.mrf.mxu0
      %443 = vmatprep.mubr.bf16.mxu0 %v227
      %444 = vmatmul.mubr.bf16.gmra.mxu0 %v226
      %v445 = vpop.f32.mrf.mxu0
      %v446 = vadd.f32 0.0, %v445
      %v447 = vpop.f32.mrf.mxu0
      %v448 = vpop.f32.mrf.mxu0
      %v449 = vadd.f32 0.0, %v448
      %v450 = vpop.f32.mrf.mxu0
      %451 = vmatprep.mubr.bf16.mxu0 %v229
      %452 = vmatmul.mubr.bf16.gmra.mxu0 %v228
      %v453 = vpop.f32.mrf.mxu0
      %v454 = vadd.f32 0.0, %v453
      %v455 = vpop.f32.mrf.mxu0
      %v456 = vpop.f32.mrf.mxu0
      %v457 = vadd.f32 0.0, %v456
      %v458 = vpop.f32.mrf.mxu0
      %459 = vdwg.mxu0
      %p460 = scmp.eq.s32.totalorder %s19, 0
      // Predicated region
      $region33: #{gcn_pny_forward.7} parent=31 // pred_check
        %p461 = pneg %p460
      $region34: #{gcn_pny_forward.7} parent=31 // pred_check_branch
        %463 = sbr.rel (%p461) target = $region36
      $region35: #{gcn_pny_forward.7} parent=31 // pred_region
        %464 = vst [vmem:[#allocation2] sm:$0xff] %v398
        %465 = vst [vmem:[#allocation2 + $0x8] sm:$0xff] %v401
        %466 = vst [vmem:[#allocation2 + $0x10] sm:$0xff] %v406
        %467 = vst [vmem:[#allocation2 + $0x18] sm:$0xff] %v409
        %468 = vst [vmem:[#allocation2 + $0x20] sm:$0xff] %v414
        %469 = vst [vmem:[#allocation2 + $0x28] sm:$0xff] %v417
        %470 = vst [vmem:[#allocation2 + $0x30] sm:$0xff] %v422
        %471 = vst [vmem:[#allocation2 + $0x38] sm:$0xff] %v425
        %472 = vst [vmem:[#allocation2 + $0x40] sm:$0xff] %v430
        %473 = vst [vmem:[#allocation2 + $0x48] sm:$0xff] %v433
        %474 = vst [vmem:[#allocation2 + $0x50] sm:$0xff] %v438
        %475 = vst [vmem:[#allocation2 + $0x58] sm:$0xff] %v441
        %476 = vst [vmem:[#allocation2 + $0x60] sm:$0xff] %v446
        %477 = vst [vmem:[#allocation2 + $0x68] sm:$0xff] %v449
        %478 = vst [vmem:[#allocation2 + $0x70] sm:$0xff] %v454
        %479 = vst [vmem:[#allocation2 + $0x78] sm:$0xff] %v457
      $region36: #{gcn_pny_forward.7} parent=31 // pred_fallthru
        _
      %p480 = scmp.gt.s32.totalorder %s19, 0
      // Predicated region
      $region37: #{gcn_pny_forward.7} parent=31 // pred_check
        %p481 = pneg %p480
      $region38: #{gcn_pny_forward.7} parent=31 // pred_check_branch
        %483 = sbr.rel (%p481) target = $region40
      $region39: #{gcn_pny_forward.7} parent=31 // pred_region
        %v484 = vld [vmem:[#allocation2] sm:$0xff]
        %v485 = vld [vmem:[#allocation2 + $0x8] sm:$0xff]
        %v486 = vld [vmem:[#allocation2 + $0x10] sm:$0xff]
        %v487 = vld [vmem:[#allocation2 + $0x18] sm:$0xff]
        %v488 = vld [vmem:[#allocation2 + $0x20] sm:$0xff]
        %v489 = vld [vmem:[#allocation2 + $0x28] sm:$0xff]
        %v490 = vld [vmem:[#allocation2 + $0x30] sm:$0xff]
        %v491 = vld [vmem:[#allocation2 + $0x38] sm:$0xff]
        %v492 = vld [vmem:[#allocation2 + $0x40] sm:$0xff]
        %v493 = vld [vmem:[#allocation2 + $0x48] sm:$0xff]
        %v494 = vld [vmem:[#allocation2 + $0x50] sm:$0xff]
        %v495 = vld [vmem:[#allocation2 + $0x58] sm:$0xff]
        %v496 = vld [vmem:[#allocation2 + $0x60] sm:$0xff]
        %v497 = vld [vmem:[#allocation2 + $0x68] sm:$0xff]
        %v498 = vld [vmem:[#allocation2 + $0x70] sm:$0xff]
        %v499 = vld [vmem:[#allocation2 + $0x78] sm:$0xff]
        %v500 = vadd.f32 %v484, %v398
        %v501 = vadd.f32 %v485, %v401
        %v502 = vadd.f32 %v486, %v406
        %v503 = vadd.f32 %v487, %v409
        %v504 = vadd.f32 %v488, %v414
        %v505 = vadd.f32 %v489, %v417
        %v506 = vadd.f32 %v490, %v422
        %v507 = vadd.f32 %v491, %v425
        %v508 = vadd.f32 %v492, %v430
        %v509 = vadd.f32 %v493, %v433
        %v510 = vadd.f32 %v494, %v438
        %v511 = vadd.f32 %v495, %v441
        %v512 = vadd.f32 %v496, %v446
        %v513 = vadd.f32 %v497, %v449
        %v514 = vadd.f32 %v498, %v454
        %v515 = vadd.f32 %v499, %v457
        %516 = vst [vmem:[#allocation2] sm:$0xff] %v500
        %517 = vst [vmem:[#allocation2 + $0x8] sm:$0xff] %v501
        %518 = vst [vmem:[#allocation2 + $0x10] sm:$0xff] %v502
        %519 = vst [vmem:[#allocation2 + $0x18] sm:$0xff] %v503
        %520 = vst [vmem:[#allocation2 + $0x20] sm:$0xff] %v504
        %521 = vst [vmem:[#allocation2 + $0x28] sm:$0xff] %v505
        %522 = vst [vmem:[#allocation2 + $0x30] sm:$0xff] %v506
        %523 = vst [vmem:[#allocation2 + $0x38] sm:$0xff] %v507
        %524 = vst [vmem:[#allocation2 + $0x40] sm:$0xff] %v508
        %525 = vst [vmem:[#allocation2 + $0x48] sm:$0xff] %v509
        %526 = vst [vmem:[#allocation2 + $0x50] sm:$0xff] %v510
        %527 = vst [vmem:[#allocation2 + $0x58] sm:$0xff] %v511
        %528 = vst [vmem:[#allocation2 + $0x60] sm:$0xff] %v512
        %529 = vst [vmem:[#allocation2 + $0x68] sm:$0xff] %v513
        %530 = vst [vmem:[#allocation2 + $0x70] sm:$0xff] %v514
        %531 = vst [vmem:[#allocation2 + $0x78] sm:$0xff] %v515
      $region40: #{gcn_pny_forward.7} parent=31 // pred_fallthru
        _
      // Predicated region
      $region41: #{gcn_pny_forward.7} parent=31 // pred_check
        %p532 = pneg %p460
      $region42: #{gcn_pny_forward.7} parent=31 // pred_check_branch
        %534 = sbr.rel (%p532) target = $region44
      $region43: #{gcn_pny_forward.7} parent=31 // pred_region
        %v535 = vld [vmem:[#allocation2] sm:$0xff]
        %v536 = vld [vmem:[#allocation2 + $0x8] sm:$0xff]
        %v537 = vld [vmem:[#allocation2 + $0x10] sm:$0xff]
        %v538 = vld [vmem:[#allocation2 + $0x18] sm:$0xff]
        %v539 = vld [vmem:[#allocation2 + $0x20] sm:$0xff]
        %v540 = vld [vmem:[#allocation2 + $0x28] sm:$0xff]
        %v541 = vld [vmem:[#allocation2 + $0x30] sm:$0xff]
        %v542 = vld [vmem:[#allocation2 + $0x38] sm:$0xff]
        %v543 = vld [vmem:[#allocation2 + $0x40] sm:$0xff]
        %v544 = vld [vmem:[#allocation2 + $0x48] sm:$0xff]
        %v545 = vld [vmem:[#allocation2 + $0x50] sm:$0xff]
        %v546 = vld [vmem:[#allocation2 + $0x58] sm:$0xff]
        %v547 = vld [vmem:[#allocation2 + $0x60] sm:$0xff]
        %v548 = vld [vmem:[#allocation2 + $0x68] sm:$0xff]
        %v549 = vld [vmem:[#allocation2 + $0x70] sm:$0xff]
        %v550 = vld [vmem:[#allocation2 + $0x78] sm:$0xff]
        %v551 = vld [vmem:[%s2] sm:$0x1]
        %v553 = vlaneseq
        %v554 = vshrl.u32 %v553, 7
        %v555 = vsub.s32 0, %v554
        %v556 = vrot.slane %v551, %v555
        %v558 = vadd.f32 %v535, %v556
        %v559 = vadd.f32 %v536, %v556
        %v560 = vadd.f32 %v537, %v556
        %v561 = vadd.f32 %v538, %v556
        %v562 = vadd.f32 %v539, %v556
        %v563 = vadd.f32 %v540, %v556
        %v564 = vadd.f32 %v541, %v556
        %v565 = vadd.f32 %v542, %v556
        %v566 = vadd.f32 %v543, %v556
        %v567 = vadd.f32 %v544, %v556
        %v568 = vadd.f32 %v545, %v556
        %v569 = vadd.f32 %v546, %v556
        %v570 = vadd.f32 %v547, %v556
        %v571 = vadd.f32 %v548, %v556
        %v572 = vadd.f32 %v549, %v556
        %v573 = vadd.f32 %v550, %v556
        %574 = vst [vmem:[%s203] sm:$0xff] %v558
        %575 = vst [vmem:[%s203 + $0x8] sm:$0xff] %v559
        %576 = vst [vmem:[%s203 + $0x10] sm:$0xff] %v560
        %577 = vst [vmem:[%s203 + $0x18] sm:$0xff] %v561
        %578 = vst [vmem:[%s203 + $0x20] sm:$0xff] %v562
        %579 = vst [vmem:[%s203 + $0x28] sm:$0xff] %v563
        %580 = vst [vmem:[%s203 + $0x30] sm:$0xff] %v564
        %581 = vst [vmem:[%s203 + $0x38] sm:$0xff] %v565
        %582 = vst [vmem:[%s203 + $0x40] sm:$0xff] %v566
        %583 = vst [vmem:[%s203 + $0x48] sm:$0xff] %v567
        %584 = vst [vmem:[%s203 + $0x50] sm:$0xff] %v568
        %585 = vst [vmem:[%s203 + $0x58] sm:$0xff] %v569
        %586 = vst [vmem:[%s203 + $0x60] sm:$0xff] %v570
        %587 = vst [vmem:[%s203 + $0x68] sm:$0xff] %v571
        %588 = vst [vmem:[%s203 + $0x70] sm:$0xff] %v572
        %589 = vst [vmem:[%s203 + $0x78] sm:$0xff] %v573
      $region44: #{gcn_pny_forward.7} parent=31 // pred_fallthru
        _
      %s590 = smul.u32 16, %s18
      %p591 = scmp.lt.s32.totalorder %s590, 31
      %s592 = scalar_select %p591, %s590, 31
      %s593 = smul.addr %s592, 8
      %s594 = scalar_lea.vmem %s3, %s593
      // Predicated region
      $region45: #{gcn_pny_forward.7} parent=31 // pred_check
        %p595 = pneg %p114
      $region46: #{gcn_pny_forward.7} parent=31 // pred_check_branch
        %597 = sbr.rel (%p595) target = $region48
      $region47: #{gcn_pny_forward.7} parent=31 // pred_region
        %s598 = smul.u32 16, %s18
      $region48: #{gcn_pny_forward.7} parent=31 // pred_fallthru
        _
    $region32: #{gcn_pny_forward.7} parent=5 // pred_fallthru
      _
    %p599 = scmp.le.s32.totalorder 2, %s9
    // Predicated region
    $region49: #{gcn_pny_forward.7} parent=5 // pred_check
      %p600 = pneg %p599
    $region50: #{gcn_pny_forward.7} parent=5 // pred_check_branch
      %602 = sbr.rel (%p600) target = $region52
    $region51: #{gcn_pny_forward.7} parent=5 // pred_region
      %s603 = ssub.s32 %s9, 2
      // Predicated region
      $region53: #{gcn_pny_forward.7} parent=51 // pred_check
        %p604 = pneg %p120
      $region54: #{gcn_pny_forward.7} parent=51 // pred_check_branch
        %606 = sbr.rel (%p604) target = $region56
      $region55: #{gcn_pny_forward.7} parent=51 // pred_region
        %s607 = smul.u32 16, %s20
        %p608 = scmp.lt.s32.totalorder %s607, 31
        %s609 = scalar_select %p608, %s607, 31
        %s610 = smul.addr %s609, 8
        %s611 = scalar_lea.vmem %s3, %s610
      $region56: #{gcn_pny_forward.7} parent=51 // pred_fallthru
        _
    $region52: #{gcn_pny_forward.7} parent=5 // pred_fallthru
      _
  $region6: #{gcn_pny_forward.7} parent=0 // loop_footer
    %s13 = sadd.s32 1, %s9
  $region7: #{gcn_pny_forward.7} parent=0 // loop_footer_branch
    %8 = sbr.rel target = $region3
  $region8: #{gcn_pny_forward.7} parent=0 // loop_exit
    _

// kernel: gcn_pny_forward.6
$region0: #{gcn_pny_forward.6}
  #allocation0 [shape = 'u32[]', space=smem, size = 0x4, offset = 0x4, fixed_abs, tag = 'smem constant byte address 0x4 - core index']
  #allocation1 [shape = 'u32[144,128]{1,0:T(1,128)}', space=vmem, size = 0x12000, scoped, tag = 'internal scratch']
  %s0 = inlined_call_operand.vmem [shape: bf16[256,128], index: 0, kind: input, shape index: {}]
  %s1 = inlined_call_operand.vmem [shape: f32[256,1], index: 1, kind: input, shape index: {}]
  %s2 = inlined_call_operand.vmem [shape: bf16[128,128], index: 2, kind: input, shape index: {}]
  %s3 = inlined_call_operand.vmem [shape: bf16[256,128], index: 3, kind: output, shape index: {}]
  %s4 = sld [smem:[#allocation0]]
  $region22: #{gcn_pny_forward.6} parent=0
    _
  %s6 = ssub.s32 1, %s4
  %s7 = scalar_select 0, %s6, %s4
  // Predicated region
  $region2: #{gcn_pny_forward.6} parent=0 // pred_check
    _
  $region3: #{gcn_pny_forward.6} parent=0 // pred_check_branch
    %9 = sbr.rel (0) target = $region5
  $region4: #{gcn_pny_forward.6} parent=0 // pred_region
    _
  $region5: #{gcn_pny_forward.6} parent=0 // pred_fallthru
    _
  // Predicated region
  $region6: #{gcn_pny_forward.6} parent=0 // pred_check
    _
  $region7: #{gcn_pny_forward.6} parent=0 // pred_check_branch
    %11 = sbr.rel (0) target = $region9
  $region8: #{gcn_pny_forward.6} parent=0 // pred_region
    _
  $region9: #{gcn_pny_forward.6} parent=0 // pred_fallthru
    _
  // Predicated region
  $region10: #{gcn_pny_forward.6} parent=0 // pred_check
    _
  $region11: #{gcn_pny_forward.6} parent=0 // pred_check_branch
    %13 = sbr.rel (0) target = $region13
  $region12: #{gcn_pny_forward.6} parent=0 // pred_region
    _
  $region13: #{gcn_pny_forward.6} parent=0 // pred_fallthru
    _
  %v15 = vld [vmem:[%s0] sm:$0xf]
  %v16 = vld [vmem:[%s0 + $0x4] sm:$0xf]
  %v17 = vld [vmem:[%s0 + $0x8] sm:$0xf]
  %v18 = vld [vmem:[%s0 + $0xc] sm:$0xf]
  %v19 = vld [vmem:[%s0 + $0x10] sm:$0xf]
  %v20 = vld [vmem:[%s0 + $0x14] sm:$0xf]
  %v21 = vld [vmem:[%s0 + $0x18] sm:$0xf]
  %v22 = vld [vmem:[%s0 + $0x1c] sm:$0xf]
  %v23 = vld [vmem:[%s0 + $0x20] sm:$0xf]
  %v24 = vld [vmem:[%s0 + $0x24] sm:$0xf]
  %v25 = vld [vmem:[%s0 + $0x28] sm:$0xf]
  %v26 = vld [vmem:[%s0 + $0x2c] sm:$0xf]
  %v27 = vld [vmem:[%s0 + $0x30] sm:$0xf]
  %v28 = vld [vmem:[%s0 + $0x34] sm:$0xf]
  %v29 = vld [vmem:[%s0 + $0x38] sm:$0xf]
  %v30 = vld [vmem:[%s0 + $0x3c] sm:$0xf]
  %v31 = vld [vmem:[%s0 + $0x40] sm:$0xf]
  %v32 = vld [vmem:[%s0 + $0x44] sm:$0xf]
  %v33 = vld [vmem:[%s0 + $0x48] sm:$0xf]
  %v34 = vld [vmem:[%s0 + $0x4c] sm:$0xf]
  %v35 = vld [vmem:[%s0 + $0x50] sm:$0xf]
  %v36 = vld [vmem:[%s0 + $0x54] sm:$0xf]
  %v37 = vld [vmem:[%s0 + $0x58] sm:$0xf]
  %v38 = vld [vmem:[%s0 + $0x5c] sm:$0xf]
  %v39 = vld [vmem:[%s0 + $0x60] sm:$0xf]
  %v40 = vld [vmem:[%s0 + $0x64] sm:$0xf]
  %v41 = vld [vmem:[%s0 + $0x68] sm:$0xf]
  %v42 = vld [vmem:[%s0 + $0x6c] sm:$0xf]
  %v43 = vld [vmem:[%s0 + $0x70] sm:$0xf]
  %v44 = vld [vmem:[%s0 + $0x74] sm:$0xf]
  %v45 = vld [vmem:[%s0 + $0x78] sm:$0xf]
  %v46 = vld [vmem:[%s0 + $0x7c] sm:$0xf]
  %v47 = vunpack.c.l.bf16 %v15
  %v48 = vunpack.c.l.bf16 %v16
  %v49 = vunpack.c.l.bf16 %v17
  %v50 = vunpack.c.l.bf16 %v18
  %v51 = vunpack.c.l.bf16 %v19
  %v52 = vunpack.c.l.bf16 %v20
  %v53 = vunpack.c.l.bf16 %v21
  %v54 = vunpack.c.l.bf16 %v22
  %v55 = vunpack.c.l.bf16 %v23
  %v56 = vunpack.c.l.bf16 %v24
  %v57 = vunpack.c.l.bf16 %v25
  %v58 = vunpack.c.l.bf16 %v26
  %v59 = vunpack.c.l.bf16 %v27
  %v60 = vunpack.c.l.bf16 %v28
  %v61 = vunpack.c.l.bf16 %v29
  %v62 = vunpack.c.l.bf16 %v30
  %v63 = vunpack.c.l.bf16 %v31
  %v64 = vunpack.c.l.bf16 %v32
  %v65 = vunpack.c.l.bf16 %v33
  %v66 = vunpack.c.l.bf16 %v34
  %v67 = vunpack.c.l.bf16 %v35
  %v68 = vunpack.c.l.bf16 %v36
  %v69 = vunpack.c.l.bf16 %v37
  %v70 = vunpack.c.l.bf16 %v38
  %v71 = vunpack.c.l.bf16 %v39
  %v72 = vunpack.c.l.bf16 %v40
  %v73 = vunpack.c.l.bf16 %v41
  %v74 = vunpack.c.l.bf16 %v42
  %v75 = vunpack.c.l.bf16 %v43
  %v76 = vunpack.c.l.bf16 %v44
  %v77 = vunpack.c.l.bf16 %v45
  %v78 = vunpack.c.l.bf16 %v46
  %v79 = vld [vmem:[%s1] sm:$0xff]
  %v80 = vld [vmem:[%s1 + $0x8] sm:$0xff]
  %v81 = vld [vmem:[%s1 + $0x10] sm:$0xff]
  %v82 = vld [vmem:[%s1 + $0x18] sm:$0xff]
  %v83 = vld [vmem:[%s1 + $0x20] sm:$0xff]
  %v84 = vld [vmem:[%s1 + $0x28] sm:$0xff]
  %v85 = vld [vmem:[%s1 + $0x30] sm:$0xff]
  %v86 = vld [vmem:[%s1 + $0x38] sm:$0xff]
  %v87 = vld [vmem:[%s1 + $0x40] sm:$0xff]
  %v88 = vld [vmem:[%s1 + $0x48] sm:$0xff]
  %v89 = vld [vmem:[%s1 + $0x50] sm:$0xff]
  %v90 = vld [vmem:[%s1 + $0x58] sm:$0xff]
  %v91 = vld [vmem:[%s1 + $0x60] sm:$0xff]
  %v92 = vld [vmem:[%s1 + $0x68] sm:$0xff]
  %v93 = vld [vmem:[%s1 + $0x70] sm:$0xff]
  %v94 = vld [vmem:[%s1 + $0x78] sm:$0xff]
  %v95 = vld [vmem:[%s1 + $0x80] sm:$0xff]
  %v96 = vld [vmem:[%s1 + $0x88] sm:$0xff]
  %v97 = vld [vmem:[%s1 + $0x90] sm:$0xff]
  %v98 = vld [vmem:[%s1 + $0x98] sm:$0xff]
  %v99 = vld [vmem:[%s1 + $0xa0] sm:$0xff]
  %v100 = vld [vmem:[%s1 + $0xa8] sm:$0xff]
  %v101 = vld [vmem:[%s1 + $0xb0] sm:$0xff]
  %v102 = vld [vmem:[%s1 + $0xb8] sm:$0xff]
  %v103 = vld [vmem:[%s1 + $0xc0] sm:$0xff]
  %v104 = vld [vmem:[%s1 + $0xc8] sm:$0xff]
  %v105 = vld [vmem:[%s1 + $0xd0] sm:$0xff]
  %v106 = vld [vmem:[%s1 + $0xd8] sm:$0xff]
  %v107 = vld [vmem:[%s1 + $0xe0] sm:$0xff]
  %v108 = vld [vmem:[%s1 + $0xe8] sm:$0xff]
  %v109 = vld [vmem:[%s1 + $0xf0] sm:$0xff]
  %v110 = vld [vmem:[%s1 + $0xf8] sm:$0xff]
  %112 = vset.pattern.permute.xlu0 0
  %113 = vperm.xlu0 %112, %v79
  %v114 = vpop.permute.xlu0 %113
  %117 = vset.pattern.permute.xlu0 0
  %118 = vperm.xlu0 %117, %v80
  %v119 = vpop.permute.xlu0 %118
  %122 = vset.pattern.permute.xlu0 0
  %123 = vperm.xlu0 %122, %v81
  %v124 = vpop.permute.xlu0 %123
  %127 = vset.pattern.permute.xlu0 0
  %128 = vperm.xlu0 %127, %v82
  %v129 = vpop.permute.xlu0 %128
  %132 = vset.pattern.permute.xlu0 0
  %133 = vperm.xlu0 %132, %v83
  %v134 = vpop.permute.xlu0 %133
  %137 = vset.pattern.permute.xlu0 0
  %138 = vperm.xlu0 %137, %v84
  %v139 = vpop.permute.xlu0 %138
  %142 = vset.pattern.permute.xlu0 0
  %143 = vperm.xlu0 %142, %v85
  %v144 = vpop.permute.xlu0 %143
  %147 = vset.pattern.permute.xlu0 0
  %148 = vperm.xlu0 %147, %v86
  %v149 = vpop.permute.xlu0 %148
  %152 = vset.pattern.permute.xlu0 0
  %153 = vperm.xlu0 %152, %v87
  %v154 = vpop.permute.xlu0 %153
  %157 = vset.pattern.permute.xlu0 0
  %158 = vperm.xlu0 %157, %v88
  %v159 = vpop.permute.xlu0 %158
  %162 = vset.pattern.permute.xlu0 0
  %163 = vperm.xlu0 %162, %v89
  %v164 = vpop.permute.xlu0 %163
  %167 = vset.pattern.permute.xlu0 0
  %168 = vperm.xlu0 %167, %v90
  %v169 = vpop.permute.xlu0 %168
  %172 = vset.pattern.permute.xlu0 0
  %173 = vperm.xlu0 %172, %v91
  %v174 = vpop.permute.xlu0 %173
  %177 = vset.pattern.permute.xlu0 0
  %178 = vperm.xlu0 %177, %v92
  %v179 = vpop.permute.xlu0 %178
  %182 = vset.pattern.permute.xlu0 0
  %183 = vperm.xlu0 %182, %v93
  %v184 = vpop.permute.xlu0 %183
  %187 = vset.pattern.permute.xlu0 0
  %188 = vperm.xlu0 %187, %v94
  %v189 = vpop.permute.xlu0 %188
  %192 = vset.pattern.permute.xlu0 0
  %193 = vperm.xlu0 %192, %v95
  %v194 = vpop.permute.xlu0 %193
  %197 = vset.pattern.permute.xlu0 0
  %198 = vperm.xlu0 %197, %v96
  %v199 = vpop.permute.xlu0 %198
  %202 = vset.pattern.permute.xlu0 0
  %203 = vperm.xlu0 %202, %v97
  %v204 = vpop.permute.xlu0 %203
  %207 = vset.pattern.permute.xlu0 0
  %208 = vperm.xlu0 %207, %v98
  %v209 = vpop.permute.xlu0 %208
  %212 = vset.pattern.permute.xlu0 0
  %213 = vperm.xlu0 %212, %v99
  %v214 = vpop.permute.xlu0 %213
  %217 = vset.pattern.permute.xlu0 0
  %218 = vperm.xlu0 %217, %v100
  %v219 = vpop.permute.xlu0 %218
  %222 = vset.pattern.permute.xlu0 0
  %223 = vperm.xlu0 %222, %v101
  %v224 = vpop.permute.xlu0 %223
  %227 = vset.pattern.permute.xlu0 0
  %228 = vperm.xlu0 %227, %v102
  %v229 = vpop.permute.xlu0 %228
  %232 = vset.pattern.permute.xlu0 0
  %233 = vperm.xlu0 %232, %v103
  %v234 = vpop.permute.xlu0 %233
  %237 = vset.pattern.permute.xlu0 0
  %238 = vperm.xlu0 %237, %v104
  %v239 = vpop.permute.xlu0 %238
  %242 = vset.pattern.permute.xlu0 0
  %243 = vperm.xlu0 %242, %v105
  %v244 = vpop.permute.xlu0 %243
  %247 = vset.pattern.permute.xlu0 0
  %248 = vperm.xlu0 %247, %v106
  %v249 = vpop.permute.xlu0 %248
  %252 = vset.pattern.permute.xlu0 0
  %253 = vperm.xlu0 %252, %v107
  %v254 = vpop.permute.xlu0 %253
  %257 = vset.pattern.permute.xlu0 0
  %258 = vperm.xlu0 %257, %v108
  %v259 = vpop.permute.xlu0 %258
  %262 = vset.pattern.permute.xlu0 0
  %263 = vperm.xlu0 %262, %v109
  %v264 = vpop.permute.xlu0 %263
  %267 = vset.pattern.permute.xlu0 0
  %268 = vperm.xlu0 %267, %v110
  %v269 = vpop.permute.xlu0 %268
  %v271 = vmul.f32 %v47, %v114
  %v272 = vmul.f32 %v48, %v119
  %v273 = vmul.f32 %v49, %v124
  %v274 = vmul.f32 %v50, %v129
  %v275 = vmul.f32 %v51, %v134
  %v276 = vmul.f32 %v52, %v139
  %v277 = vmul.f32 %v53, %v144
  %v278 = vmul.f32 %v54, %v149
  %v279 = vmul.f32 %v55, %v154
  %v280 = vmul.f32 %v56, %v159
  %v281 = vmul.f32 %v57, %v164
  %v282 = vmul.f32 %v58, %v169
  %v283 = vmul.f32 %v59, %v174
  %v284 = vmul.f32 %v60, %v179
  %v285 = vmul.f32 %v61, %v184
  %v286 = vmul.f32 %v62, %v189
  %v287 = vmul.f32 %v63, %v194
  %v288 = vmul.f32 %v64, %v199
  %v289 = vmul.f32 %v65, %v204
  %v290 = vmul.f32 %v66, %v209
  %v291 = vmul.f32 %v67, %v214
  %v292 = vmul.f32 %v68, %v219
  %v293 = vmul.f32 %v69, %v224
  %v294 = vmul.f32 %v70, %v229
  %v295 = vmul.f32 %v71, %v234
  %v296 = vmul.f32 %v72, %v239
  %v297 = vmul.f32 %v73, %v244
  %v298 = vmul.f32 %v74, %v249
  %v299 = vmul.f32 %v75, %v254
  %v300 = vmul.f32 %v76, %v259
  %v301 = vmul.f32 %v77, %v264
  %v302 = vmul.f32 %v78, %v269
  %v303 = vpack.c.bf16 %v272, %v271
  %v304 = vpack.c.bf16 %v274, %v273
  %v305 = vpack.c.bf16 %v276, %v275
  %v306 = vpack.c.bf16 %v278, %v277
  %v307 = vpack.c.bf16 %v280, %v279
  %v308 = vpack.c.bf16 %v282, %v281
  %v309 = vpack.c.bf16 %v284, %v283
  %v310 = vpack.c.bf16 %v286, %v285
  %v311 = vpack.c.bf16 %v288, %v287
  %v312 = vpack.c.bf16 %v290, %v289
  %v313 = vpack.c.bf16 %v292, %v291
  %v314 = vpack.c.bf16 %v294, %v293
  %v315 = vpack.c.bf16 %v296, %v295
  %v316 = vpack.c.bf16 %v298, %v297
  %v317 = vpack.c.bf16 %v300, %v299
  %v318 = vpack.c.bf16 %v302, %v301
  %v319 = vld [vmem:[%s2] sm:$0xf]
  %v320 = vld [vmem:[%s2 + $0x4] sm:$0xf]
  %v321 = vld [vmem:[%s2 + $0x8] sm:$0xf]
  %v322 = vld [vmem:[%s2 + $0xc] sm:$0xf]
  %v323 = vld [vmem:[%s2 + $0x10] sm:$0xf]
  %v324 = vld [vmem:[%s2 + $0x14] sm:$0xf]
  %v325 = vld [vmem:[%s2 + $0x18] sm:$0xf]
  %v326 = vld [vmem:[%s2 + $0x1c] sm:$0xf]
  %v327 = vld [vmem:[%s2 + $0x20] sm:$0xf]
  %v328 = vld [vmem:[%s2 + $0x24] sm:$0xf]
  %v329 = vld [vmem:[%s2 + $0x28] sm:$0xf]
  %v330 = vld [vmem:[%s2 + $0x2c] sm:$0xf]
  %v331 = vld [vmem:[%s2 + $0x30] sm:$0xf]
  %v332 = vld [vmem:[%s2 + $0x34] sm:$0xf]
  %v333 = vld [vmem:[%s2 + $0x38] sm:$0xf]
  %v334 = vld [vmem:[%s2 + $0x3c] sm:$0xf]
  %v351 = vunpack.c.l.b16 %v319
  %v352 = vunpack.c.l.b16 %v320
  %v353 = vunpack.c.l.b16 %v321
  %v354 = vunpack.c.l.b16 %v322
  %v355 = vunpack.c.l.b16 %v323
  %v356 = vunpack.c.l.b16 %v324
  %v357 = vunpack.c.l.b16 %v325
  %v358 = vunpack.c.l.b16 %v326
  %v359 = vunpack.c.l.b16 %v327
  %v360 = vunpack.c.l.b16 %v328
  %v361 = vunpack.c.l.b16 %v329
  %v362 = vunpack.c.l.b16 %v330
  %v363 = vunpack.c.l.b16 %v331
  %v364 = vunpack.c.l.b16 %v332
  %v365 = vunpack.c.l.b16 %v333
  %v366 = vunpack.c.l.b16 %v334
  %v367 = vpack.c.b16 %v352, %v351
  %v368 = vpack.c.b16 %v354, %v353
  %v369 = vpack.c.b16 %v356, %v355
  %v370 = vpack.c.b16 %v358, %v357
  %v371 = vpack.c.b16 %v360, %v359
  %v372 = vpack.c.b16 %v362, %v361
  %v373 = vpack.c.b16 %v364, %v363
  %v374 = vpack.c.b16 %v366, %v365
  %383 = vmatprep.subr.bf16.mxu0 0
  %384 = vmatpush1.bf16.msra.mxu0 %v374
  %385 = vmatprep.subr.bf16.mxu0 0
  %386 = vmatpush1.bf16.msra.mxu0 %v373
  %387 = vmatprep.subr.bf16.mxu0 0
  %388 = vmatpush1.bf16.msra.mxu0 %v372
  %389 = vmatprep.subr.bf16.mxu0 0
  %390 = vmatpush1.bf16.msra.mxu0 %v371
  %391 = vmatprep.subr.bf16.mxu0 0
  %392 = vmatpush1.bf16.msra.mxu0 %v370
  %393 = vmatprep.subr.bf16.mxu0 0
  %394 = vmatpush1.bf16.msra.mxu0 %v369
  %395 = vmatprep.subr.bf16.mxu0 0
  %396 = vmatpush1.bf16.msra.mxu0 %v368
  %397 = vmatprep.subr.bf16.mxu0 0
  %398 = vmatpush1.bf16.msra.mxu0 %v367
  %399 = vmatprep.subr.bf16.mxu0 0
  %400 = vmatpush2.bf16.msra.mxu0 0
  %401 = vmatprep.subr.bf16.mxu0 0
  %402 = vmatpush2.bf16.msra.mxu0 0
  %403 = vmatprep.subr.bf16.mxu0 0
  %404 = vmatpush2.bf16.msra.mxu0 0
  %405 = vmatprep.subr.bf16.mxu0 0
  %406 = vmatpush2.bf16.msra.mxu0 0
  %407 = vmatprep.subr.bf16.mxu0 0
  %408 = vmatpush2.bf16.msra.mxu0 0
  %409 = vmatprep.subr.bf16.mxu0 0
  %410 = vmatpush2.bf16.msra.mxu0 0
  %411 = vmatprep.subr.bf16.mxu0 0
  %412 = vmatpush2.bf16.msra.mxu0 0
  %413 = vmatprep.subr.bf16.mxu0 0
  %414 = vmatpush2.bf16.msra.mxu0 0
  %415 = vmatprep.mubr.bf16.mxu0 0
  %416 = vmatmul.mubr.bf16.gmra.mxu0 %v303
  %v417 = vpop.f32.mrf.mxu0
  %v418 = vadd.f32 0.0, %v417
  %v419 = vpop.f32.mrf.mxu0
  %v420 = vpop.f32.mrf.mxu0
  %v421 = vadd.f32 0.0, %v420
  %v422 = vpop.f32.mrf.mxu0
  %423 = vmatprep.mubr.bf16.mxu0 0
  %424 = vmatmul.mubr.bf16.gmra.mxu0 %v304
  %v425 = vpop.f32.mrf.mxu0
  %v426 = vadd.f32 0.0, %v425
  %v427 = vpop.f32.mrf.mxu0
  %v428 = vpop.f32.mrf.mxu0
  %v429 = vadd.f32 0.0, %v428
  %v430 = vpop.f32.mrf.mxu0
  %431 = vmatprep.mubr.bf16.mxu0 0
  %432 = vmatmul.mubr.bf16.gmra.mxu0 %v305
  %v433 = vpop.f32.mrf.mxu0
  %v434 = vadd.f32 0.0, %v433
  %v435 = vpop.f32.mrf.mxu0
  %v436 = vpop.f32.mrf.mxu0
  %v437 = vadd.f32 0.0, %v436
  %v438 = vpop.f32.mrf.mxu0
  %439 = vmatprep.mubr.bf16.mxu0 0
  %440 = vmatmul.mubr.bf16.gmra.mxu0 %v306
  %v441 = vpop.f32.mrf.mxu0
  %v442 = vadd.f32 0.0, %v441
  %v443 = vpop.f32.mrf.mxu0
  %v444 = vpop.f32.mrf.mxu0
  %v445 = vadd.f32 0.0, %v444
  %v446 = vpop.f32.mrf.mxu0
  %447 = vmatprep.mubr.bf16.mxu0 0
  %448 = vmatmul.mubr.bf16.gmra.mxu0 %v307
  %v449 = vpop.f32.mrf.mxu0
  %v450 = vadd.f32 0.0, %v449
  %v451 = vpop.f32.mrf.mxu0
  %v452 = vpop.f32.mrf.mxu0
  %v453 = vadd.f32 0.0, %v452
  %v454 = vpop.f32.mrf.mxu0
  %455 = vmatprep.mubr.bf16.mxu0 0
  %456 = vmatmul.mubr.bf16.gmra.mxu0 %v308
  %v457 = vpop.f32.mrf.mxu0
  %v458 = vadd.f32 0.0, %v457
  %v459 = vpop.f32.mrf.mxu0
  %v460 = vpop.f32.mrf.mxu0
  %v461 = vadd.f32 0.0, %v460
  %v462 = vpop.f32.mrf.mxu0
  %463 = vmatprep.mubr.bf16.mxu0 0
  %464 = vmatmul.mubr.bf16.gmra.mxu0 %v309
  %v465 = vpop.f32.mrf.mxu0
  %v466 = vadd.f32 0.0, %v465
  %v467 = vpop.f32.mrf.mxu0
  %v468 = vpop.f32.mrf.mxu0
  %v469 = vadd.f32 0.0, %v468
  %v470 = vpop.f32.mrf.mxu0
  %471 = vmatprep.mubr.bf16.mxu0 0
  %472 = vmatmul.mubr.bf16.gmra.mxu0 %v310
  %v473 = vpop.f32.mrf.mxu0
  %v474 = vadd.f32 0.0, %v473
  %v475 = vpop.f32.mrf.mxu0
  %v476 = vpop.f32.mrf.mxu0
  %v477 = vadd.f32 0.0, %v476
  %v478 = vpop.f32.mrf.mxu0
  %479 = vmatprep.mubr.bf16.mxu0 0
  %480 = vmatmul.mubr.bf16.gmra.mxu0 %v311
  %v481 = vpop.f32.mrf.mxu0
  %v482 = vadd.f32 0.0, %v481
  %v483 = vpop.f32.mrf.mxu0
  %v484 = vpop.f32.mrf.mxu0
  %v485 = vadd.f32 0.0, %v484
  %v486 = vpop.f32.mrf.mxu0
  %487 = vmatprep.mubr.bf16.mxu0 0
  %488 = vmatmul.mubr.bf16.gmra.mxu0 %v312
  %v489 = vpop.f32.mrf.mxu0
  %v490 = vadd.f32 0.0, %v489
  %v491 = vpop.f32.mrf.mxu0
  %v492 = vpop.f32.mrf.mxu0
  %v493 = vadd.f32 0.0, %v492
  %v494 = vpop.f32.mrf.mxu0
  %495 = vmatprep.mubr.bf16.mxu0 0
  %496 = vmatmul.mubr.bf16.gmra.mxu0 %v313
  %v497 = vpop.f32.mrf.mxu0
  %v498 = vadd.f32 0.0, %v497
  %v499 = vpop.f32.mrf.mxu0
  %v500 = vpop.f32.mrf.mxu0
  %v501 = vadd.f32 0.0, %v500
  %v502 = vpop.f32.mrf.mxu0
  %503 = vmatprep.mubr.bf16.mxu0 0
  %504 = vmatmul.mubr.bf16.gmra.mxu0 %v314
  %v505 = vpop.f32.mrf.mxu0
  %v506 = vadd.f32 0.0, %v505
  %v507 = vpop.f32.mrf.mxu0
  %v508 = vpop.f32.mrf.mxu0
  %v509 = vadd.f32 0.0, %v508
  %v510 = vpop.f32.mrf.mxu0
  %511 = vmatprep.mubr.bf16.mxu0 0
  %512 = vmatmul.mubr.bf16.gmra.mxu0 %v315
  %v513 = vpop.f32.mrf.mxu0
  %v514 = vadd.f32 0.0, %v513
  %v515 = vpop.f32.mrf.mxu0
  %v516 = vpop.f32.mrf.mxu0
  %v517 = vadd.f32 0.0, %v516
  %v518 = vpop.f32.mrf.mxu0
  %519 = vmatprep.mubr.bf16.mxu0 0
  %520 = vmatmul.mubr.bf16.gmra.mxu0 %v316
  %v521 = vpop.f32.mrf.mxu0
  %v522 = vadd.f32 0.0, %v521
  %v523 = vpop.f32.mrf.mxu0
  %v524 = vpop.f32.mrf.mxu0
  %v525 = vadd.f32 0.0, %v524
  %v526 = vpop.f32.mrf.mxu0
  %527 = vmatprep.mubr.bf16.mxu0 0
  %528 = vmatmul.mubr.bf16.gmra.mxu0 %v317
  %v529 = vpop.f32.mrf.mxu0
  %v530 = vadd.f32 0.0, %v529
  %v531 = vpop.f32.mrf.mxu0
  %v532 = vpop.f32.mrf.mxu0
  %v533 = vadd.f32 0.0, %v532
  %v534 = vpop.f32.mrf.mxu0
  %535 = vmatprep.mubr.bf16.mxu0 0
  %536 = vmatmul.mubr.bf16.gmra.mxu0 %v318
  %v537 = vpop.f32.mrf.mxu0
  %v538 = vadd.f32 0.0, %v537
  %v539 = vpop.f32.mrf.mxu0
  %v540 = vpop.f32.mrf.mxu0
  %v541 = vadd.f32 0.0, %v540
  %v542 = vpop.f32.mrf.mxu0
  %543 = vdwg.mxu0
  %v544 = vpack.c.bf16 %v421, %v418
  %v545 = vpack.c.bf16 %v429, %v426
  %v546 = vpack.c.bf16 %v437, %v434
  %v547 = vpack.c.bf16 %v445, %v442
  %v548 = vpack.c.bf16 %v453, %v450
  %v549 = vpack.c.bf16 %v461, %v458
  %v550 = vpack.c.bf16 %v469, %v466
  %v551 = vpack.c.bf16 %v477, %v474
  %v552 = vpack.c.bf16 %v485, %v482
  %v553 = vpack.c.bf16 %v493, %v490
  %v554 = vpack.c.bf16 %v501, %v498
  %v555 = vpack.c.bf16 %v509, %v506
  %v556 = vpack.c.bf16 %v517, %v514
  %v557 = vpack.c.bf16 %v525, %v522
  %v558 = vpack.c.bf16 %v533, %v530
  %v559 = vpack.c.bf16 %v541, %v538
  %v576 = vunpack.c.l.b16 %v544
  %v577 = vunpack.c.h.b16 %v544
  %v578 = vunpack.c.l.b16 %v545
  %v579 = vunpack.c.h.b16 %v545
  %v580 = vunpack.c.l.b16 %v546
  %v581 = vunpack.c.h.b16 %v546
  %v582 = vunpack.c.l.b16 %v547
  %v583 = vunpack.c.h.b16 %v547
  %v584 = vunpack.c.l.b16 %v548
  %v585 = vunpack.c.h.b16 %v548
  %v586 = vunpack.c.l.b16 %v549
  %v587 = vunpack.c.h.b16 %v549
  %v588 = vunpack.c.l.b16 %v550
  %v589 = vunpack.c.h.b16 %v550
  %v590 = vunpack.c.l.b16 %v551
  %v591 = vunpack.c.h.b16 %v551
  %v592 = vunpack.c.l.b16 %v552
  %v593 = vunpack.c.h.b16 %v552
  %v594 = vunpack.c.l.b16 %v553
  %v595 = vunpack.c.h.b16 %v553
  %v596 = vunpack.c.l.b16 %v554
  %v597 = vunpack.c.h.b16 %v554
  %v598 = vunpack.c.l.b16 %v555
  %v599 = vunpack.c.h.b16 %v555
  %v600 = vunpack.c.l.b16 %v556
  %v601 = vunpack.c.h.b16 %v556
  %v602 = vunpack.c.l.b16 %v557
  %v603 = vunpack.c.h.b16 %v557
  %v604 = vunpack.c.l.b16 %v558
  %v605 = vunpack.c.h.b16 %v558
  %v606 = vunpack.c.l.b16 %v559
  %v607 = vunpack.c.h.b16 %v559
  %v608 = vpack.c.b16 %v576, %v576
  %v609 = vpack.c.b16 %v577, %v577
  %v610 = vpack.c.b16 %v578, %v578
  %v611 = vpack.c.b16 %v579, %v579
  %v612 = vpack.c.b16 %v580, %v580
  %v613 = vpack.c.b16 %v581, %v581
  %v614 = vpack.c.b16 %v582, %v582
  %v615 = vpack.c.b16 %v583, %v583
  %v616 = vpack.c.b16 %v584, %v584
  %v617 = vpack.c.b16 %v585, %v585
  %v618 = vpack.c.b16 %v586, %v586
  %v619 = vpack.c.b16 %v587, %v587
  %v620 = vpack.c.b16 %v588, %v588
  %v621 = vpack.c.b16 %v589, %v589
  %v622 = vpack.c.b16 %v590, %v590
  %v623 = vpack.c.b16 %v591, %v591
  %v624 = vpack.c.b16 %v592, %v592
  %v625 = vpack.c.b16 %v593, %v593
  %v626 = vpack.c.b16 %v594, %v594
  %v627 = vpack.c.b16 %v595, %v595
  %v628 = vpack.c.b16 %v596, %v596
  %v629 = vpack.c.b16 %v597, %v597
  %v630 = vpack.c.b16 %v598, %v598
  %v631 = vpack.c.b16 %v599, %v599
  %v632 = vpack.c.b16 %v600, %v600
  %v633 = vpack.c.b16 %v601, %v601
  %v634 = vpack.c.b16 %v602, %v602
  %v635 = vpack.c.b16 %v603, %v603
  %v636 = vpack.c.b16 %v604, %v604
  %v637 = vpack.c.b16 %v605, %v605
  %v638 = vpack.c.b16 %v606, %v606
  %v639 = vpack.c.b16 %v607, %v607
  %672 = vst [vmem:[%s3] sm:$0xf] %v608
  %673 = vst [vmem:[%s3 + $0x4] sm:$0xf] %v609
  %674 = vst [vmem:[%s3 + $0x8] sm:$0xf] %v610
  %675 = vst [vmem:[%s3 + $0xc] sm:$0xf] %v611
  %676 = vst [vmem:[%s3 + $0x10] sm:$0xf] %v612
  %677 = vst [vmem:[%s3 + $0x14] sm:$0xf] %v613
  %678 = vst [vmem:[%s3 + $0x18] sm:$0xf] %v614
  %679 = vst [vmem:[%s3 + $0x1c] sm:$0xf] %v615
  %680 = vst [vmem:[%s3 + $0x20] sm:$0xf] %v616
  %681 = vst [vmem:[%s3 + $0x24] sm:$0xf] %v617
  %682 = vst [vmem:[%s3 + $0x28] sm:$0xf] %v618
  %683 = vst [vmem:[%s3 + $0x2c] sm:$0xf] %v619
  %684 = vst [vmem:[%s3 + $0x30] sm:$0xf] %v620
  %685 = vst [vmem:[%s3 + $0x34] sm:$0xf] %v621
  %686 = vst [vmem:[%s3 + $0x38] sm:$0xf] %v622
  %687 = vst [vmem:[%s3 + $0x3c] sm:$0xf] %v623
  %688 = vst [vmem:[%s3 + $0x40] sm:$0xf] %v624
  %689 = vst [vmem:[%s3 + $0x44] sm:$0xf] %v625
  %690 = vst [vmem:[%s3 + $0x48] sm:$0xf] %v626
  %691 = vst [vmem:[%s3 + $0x4c] sm:$0xf] %v627
  %692 = vst [vmem:[%s3 + $0x50] sm:$0xf] %v628
  %693 = vst [vmem:[%s3 + $0x54] sm:$0xf] %v629
  %694 = vst [vmem:[%s3 + $0x58] sm:$0xf] %v630
  %695 = vst [vmem:[%s3 + $0x5c] sm:$0xf] %v631
  %696 = vst [vmem:[%s3 + $0x60] sm:$0xf] %v632
  %697 = vst [vmem:[%s3 + $0x64] sm:$0xf] %v633
  %698 = vst [vmem:[%s3 + $0x68] sm:$0xf] %v634
  %699 = vst [vmem:[%s3 + $0x6c] sm:$0xf] %v635
  %700 = vst [vmem:[%s3 + $0x70] sm:$0xf] %v636
  %701 = vst [vmem:[%s3 + $0x74] sm:$0xf] %v637
  %702 = vst [vmem:[%s3 + $0x78] sm:$0xf] %v638
  %703 = vst [vmem:[%s3 + $0x7c] sm:$0xf] %v639
  // Predicated region
  $region14: #{gcn_pny_forward.6} parent=0 // pred_check
    _
  $region15: #{gcn_pny_forward.6} parent=0 // pred_check_branch
    %705 = sbr.rel (0) target = $region17
  $region16: #{gcn_pny_forward.6} parent=0 // pred_region
    _
  $region17: #{gcn_pny_forward.6} parent=0 // pred_fallthru
    _
  // Predicated region
  $region18: #{gcn_pny_forward.6} parent=0 // pred_check
    _
  $region19: #{gcn_pny_forward.6} parent=0 // pred_check_branch
    %707 = sbr.rel (0) target = $region21
  $region20: #{gcn_pny_forward.6} parent=0 // pred_region
    _
  $region21: #{gcn_pny_forward.6} parent=0 // pred_fallthru
    _

</llo_original>
